<compile_context>
chip_gen: v7x
topology: tpu7x:2x2x1
jax: 0.10.0
libtpu: 0.0.40
codegen_flags: <defaults>
</compile_context>

<pallas_src>
import jax
import jax.numpy as jnp
from jax.experimental import pallas as pl
from jax.experimental.pallas import tpu as pltpu

# ----------------------------- config ---------------------------------------
BATCH = 2
SEQ = 8
HIDDEN = 32
N_HEADS = 4
HEAD_DIM = HIDDEN // N_HEADS
INTERMEDIATE = 64
N_LAYERS = 2
VOCAB = 100
MAX_POS = 16
NUM_CLASSES = 3
PAD_CLASSES = 128            # lane-dense classifier output, sliced to NUM_CLASSES
LN_EPS = 1e-12

# rows of the packed per-layer vector slab (L, 8, 128)
_ROW_BQKV, _ROW_BO, _ROW_B1, _ROW_B2 = 0, 1, 2, 3
_ROW_LN1G, _ROW_LN1B, _ROW_LN2G, _ROW_LN2B = 4, 5, 6, 7


# ----------------------------- kernel helpers --------------------------------
def _layernorm(x, gamma, beta):
    mu = jnp.mean(x, axis=-1, keepdims=True)
    var = jnp.mean(jnp.square(x - mu), axis=-1, keepdims=True)
    return (x - mu) * jax.lax.rsqrt(var + LN_EPS) * gamma + beta


# ----------------------------- fused kernel ----------------------------------
def _bert_fused_kernel(emb_ref, mask_ref, embg_ref, embb_ref,
                       wqkv_ref, wo_ref, w1_ref, w2_ref, vecs_ref,
                       poolw_ref, poolb_ref, fcw_ref, fcb_ref,
                       o_ref, x_vmem):
    l = pl.program_id(0)

    # First layer step: embedding LayerNorm becomes the resident activation.
    @pl.when(l == 0)
    def _():
        x_vmem[...] = _layernorm(emb_ref[...], embg_ref[...], embb_ref[...])

    x = x_vmem[...]                                   # (B*S, H) f32, resident

    vec = vecs_ref[0]                                 # (8, 128) packed per-layer vectors
    bqkv = vec[_ROW_BQKV:_ROW_BQKV + 1, :3 * HIDDEN]
    bo = vec[_ROW_BO:_ROW_BO + 1, :HIDDEN]
    b1 = vec[_ROW_B1:_ROW_B1 + 1, :INTERMEDIATE]
    b2 = vec[_ROW_B2:_ROW_B2 + 1, :HIDDEN]
    ln1g = vec[_ROW_LN1G:_ROW_LN1G + 1, :HIDDEN]
    ln1b = vec[_ROW_LN1B:_ROW_LN1B + 1, :HIDDEN]
    ln2g = vec[_ROW_LN2G:_ROW_LN2G + 1, :HIDDEN]
    ln2b = vec[_ROW_LN2B:_ROW_LN2B + 1, :HIDDEN]

    # ------------------------- self attention --------------------------------
    # Fused QKV projection over all B*S rows (bf16 MXU inputs, f32 accumulation).
    qkv = jnp.dot(x.astype(jnp.bfloat16), wqkv_ref[0],
                  preferred_element_type=jnp.float32) + bqkv
    # 1/sqrt(HEAD_DIM) is already folded into the Q columns of wqkv.
    q = qkv[:, 0 * HIDDEN:1 * HIDDEN].reshape(BATCH, SEQ, HIDDEN)
    k = qkv[:, 1 * HIDDEN:2 * HIDDEN].reshape(BATCH, SEQ, HIDDEN)
    v = qkv[:, 2 * HIDDEN:3 * HIDDEN].reshape(BATCH, SEQ, HIDDEN)
    add_mask = mask_ref[...]                          # (B, 1, S) additive mask

    ctx_heads = []
    for h in range(N_HEADS):      # static unroll; each einsum is batched over B
        lo, hi = h * HEAD_DIM, (h + 1) * HEAD_DIM
        qh = q[:, :, lo:hi].astype(jnp.bfloat16)      # (B, S, D)
        kh = k[:, :, lo:hi].astype(jnp.bfloat16)
        vh = v[:, :, lo:hi].astype(jnp.bfloat16)
        sc = jnp.einsum("bqd,bkd->bqk", qh, kh,
                        preferred_element_type=jnp.float32)
        sc = sc + add_mask                            # broadcast over queries
        sc = sc - jnp.max(sc, axis=-1, keepdims=True)
        probs = jnp.exp(sc)
        probs = probs * pl.reciprocal(jnp.sum(probs, axis=-1, keepdims=True),
                                      approx=True)
        ctx_heads.append(jnp.einsum("bqk,bkd->bqd", probs.astype(jnp.bfloat16),
                                    vh, preferred_element_type=jnp.float32))
    # Single lane-axis concat -> full-width context; no masked scratch stores.
    ctx = jnp.concatenate(ctx_heads, axis=-1).reshape(BATCH * SEQ, HIDDEN)

    attn = jnp.dot(ctx.astype(jnp.bfloat16), wo_ref[0],
                   preferred_element_type=jnp.float32) + bo
    x = _layernorm(x + attn, ln1g, ln1b)

    # ------------------------- feed forward ----------------------------------
    inter = jnp.dot(x.astype(jnp.bfloat16), w1_ref[0],
                    preferred_element_type=jnp.float32) + b1
    inter = jax.nn.gelu(inter, approximate=True)
    ffn = jnp.dot(inter.astype(jnp.bfloat16), w2_ref[0],
                  preferred_element_type=jnp.float32) + b2
    x = _layernorm(x + ffn, ln2g, ln2b)

    x_vmem[...] = x

    # Last layer step: pooler (tanh on [CLS]) + classifier, lane-dense output.
    @pl.when(l == pl.num_programs(0) - 1)
    def _():
        cls = jnp.concatenate([x[b * SEQ:b * SEQ + 1, :] for b in range(BATCH)],
                              axis=0)                 # (B, H) [CLS] rows
        pooled = jnp.tanh(
            jnp.dot(cls.astype(jnp.bfloat16), poolw_ref[...],
                    preferred_element_type=jnp.float32) + poolb_ref[...])
        logits = jnp.dot(pooled.astype(jnp.bfloat16), fcw_ref[...],
                         preferred_element_type=jnp.float32) + fcb_ref[...]
        o_ref[...] = logits.astype(o_ref.dtype)


def bert_fused_forward(emb_flat, add_mask, p):
    """emb_flat: (B*S, H) embedding sum; add_mask: (B, 1, S) additive mask."""
    n_layers = p["wqkv"].shape[0]

    def shared(arr):                 # same (full) block every grid step
        nd = arr.ndim
        return pl.BlockSpec(arr.shape, lambda l, _n=nd: (0,) * _n)

    def per_layer(arr):              # per-layer weight slab, pipelined by the grid
        nd = arr.ndim
        return pl.BlockSpec((1,) + tuple(arr.shape[1:]),
                            lambda l, _n=nd: (l,) + (0,) * (_n - 1))

    in_specs = [
        shared(emb_flat), shared(add_mask),
        shared(p["emb_ln_g"]), shared(p["emb_ln_b"]),
        per_layer(p["wqkv"]), per_layer(p["wo"]),
        per_layer(p["w1"]), per_layer(p["w2"]),
        per_layer(p["vecs"]),
        shared(p["pool_w"]), shared(p["pool_b"]),
        shared(p["fc_w"]), shared(p["fc_b"]),
    ]

    out = pl.pallas_call(
        _bert_fused_kernel,
        grid=(n_layers,),
        in_specs=in_specs,
        out_specs=pl.BlockSpec((BATCH, PAD_CLASSES), lambda l: (0, 0)),
        out_shape=jax.ShapeDtypeStruct((BATCH, PAD_CLASSES), jnp.float32),
        scratch_shapes=[pltpu.VMEM((BATCH * SEQ, HIDDEN), jnp.float32)],
        compiler_params=pltpu.CompilerParams(
            dimension_semantics=("arbitrary",),          # layer axis is sequential
            vmem_limit_bytes=48 * 1024 * 1024),
    )(emb_flat, add_mask,
      p["emb_ln_g"], p["emb_ln_b"],
      p["wqkv"], p["wo"], p["w1"], p["w2"], p["vecs"],
      p["pool_w"], p["pool_b"], p["fc_w"], p["fc_b"])
    return out[:, :NUM_CLASSES]


# ----------------------------- parameters -----------------------------------
def init_params(key):
    def nrm(k, shape, dtype=jnp.float32):
        return (0.02 * jax.random.normal(k, shape, jnp.float32)).astype(dtype)

    H, I, L = HIDDEN, INTERMEDIATE, N_LAYERS
    ks = jax.random.split(key, 9)

    # Fused Q|K|V weight; fold 1/sqrt(HEAD_DIM) into the Q columns at init
    # (biases are zero, so the Q bias needs no scaling here).
    wqkv = 0.02 * jax.random.normal(ks[3], (L, H, 3 * H), jnp.float32)
    wqkv = wqkv.at[:, :, :H].multiply(1.0 / (HEAD_DIM ** 0.5))

    # Packed per-layer small-vector slab (L, 8, 128):
    # row 0=bqkv 1=bo 2=b1 3=b2 4=ln1_g 5=ln1_b 6=ln2_g 7=ln2_b (biases zero).
    vecs = jnp.zeros((L, 8, 128), jnp.float32)
    vecs = vecs.at[:, _ROW_LN1G, :H].set(1.0)
    vecs = vecs.at[:, _ROW_LN2G, :H].set(1.0)

    params = {
        "word_emb": nrm(ks[0], (VOCAB, H)),
        "pos_emb": nrm(ks[1], (MAX_POS, H)),
        "type_emb": nrm(ks[2], (2, H)),
        "emb_ln_g": jnp.ones((1, H), jnp.float32),
        "emb_ln_b": jnp.zeros((1, H), jnp.float32),
        # bf16 weight slabs streamed per layer (f32 accumulation in-kernel).
        "wqkv": wqkv.astype(jnp.bfloat16),
        "wo": nrm(ks[4], (L, H, H), jnp.bfloat16),
        "w1": nrm(ks[5], (L, H, I), jnp.bfloat16),
        "w2": nrm(ks[6], (L, I, H), jnp.bfloat16),
        "vecs": vecs,
        "pool_w": nrm(ks[7], (H, H), jnp.bfloat16),
        "pool_b": jnp.zeros((1, H), jnp.float32),
    }
    # Classifier head, zero-padded to a lane-dense 128-wide output.
    fc_w = jnp.zeros((H, PAD_CLASSES), jnp.float32)
    fc_w = fc_w.at[:, :NUM_CLASSES].set(
        0.02 * jax.random.normal(ks[8], (H, NUM_CLASSES), jnp.float32))
    params["fc_w"] = fc_w.astype(jnp.bfloat16)
    params["fc_b"] = jnp.zeros((1, PAD_CLASSES), jnp.float32)
    return params


# ----------------------------- forward ---------------------------------------
def bert_classifier_forward(params, input_ids, attention_mask):
    b, s = input_ids.shape
    # Embedding table gather + sum is XLA glue (data-dependent gather); every
    # subsequent op runs inside the single fused Pallas kernel.
    word = jnp.take(params["word_emb"], input_ids, axis=0)          # (B,S,H)
    pos = params["pos_emb"][:s][None, :, :]                         # (1,S,H)
    tok = params["type_emb"][0][None, None, :]                      # token_type_ids == 0
    emb = (word + pos + tok).reshape(b * s, HIDDEN)                 # (B*S, H)
    # BERT-style additive mask: (1 - mask) * -10000
    add_mask = ((1.0 - attention_mask.astype(jnp.float32)) * -10000.0
                ).reshape(b, 1, s)
    return bert_fused_forward(emb, add_mask, params)


# ----------------------------- main ------------------------------------------
if __name__ == "__main__":
    key = jax.random.PRNGKey(0)
    pkey, ikey = jax.random.split(key)
    params = init_params(pkey)

    input_ids = jax.random.randint(ikey, (BATCH, SEQ), 0, VOCAB, dtype=jnp.int32)
    attention_mask = jnp.ones((BATCH, SEQ), dtype=jnp.int32)

    fwd = jax.jit(bert_classifier_forward)
    logits = fwd(params, input_ids, attention_mask)
    jax.block_until_ready(logits)

    assert logits.shape == (BATCH, NUM_CLASSES)
    assert bool(jnp.all(jnp.isfinite(logits)))
    print("KERNEL_OK")
</pallas_src>

<mosaic_0001>
module attributes {stable_mosaic.version = 11 : i64} {
  func.func @_bert_fused_kernel(%arg0: i32, %arg1: memref<16x32xf32, #tpu.memory_space<vmem>>, %arg2: memref<2x1x8xf32, #tpu.memory_space<vmem>>, %arg3: memref<1x32xf32, #tpu.memory_space<vmem>>, %arg4: memref<1x32xf32, #tpu.memory_space<vmem>>, %arg5: memref<1x32x96xbf16, #tpu.memory_space<vmem>>, %arg6: memref<1x32x32xbf16, #tpu.memory_space<vmem>>, %arg7: memref<1x32x64xbf16, #tpu.memory_space<vmem>>, %arg8: memref<1x64x32xbf16, #tpu.memory_space<vmem>>, %arg9: memref<1x8x128xf32, #tpu.memory_space<vmem>>, %arg10: memref<32x32xbf16, #tpu.memory_space<vmem>>, %arg11: memref<1x32xf32, #tpu.memory_space<vmem>>, %arg12: memref<32x128xbf16, #tpu.memory_space<vmem>>, %arg13: memref<1x128xf32, #tpu.memory_space<vmem>>, %arg14: memref<2x128xf32, #tpu.memory_space<vmem>>, %arg15: memref<16x32xf32, #tpu.memory_space<vmem>>) attributes {dimension_semantics = [#tpu.dimension_semantics<arbitrary>], iteration_bounds = array<i64: 2>, scalar_prefetch = 0 : i64, scratch_operands = 1 : i64, tpu.core_type = #tpu.core_type<tc>, window_params = [{pipeline_mode = #tpu.pipeline_mode<synchronous>, transform_indices = @transform_0, window_bounds = array<i64: 16, 32>}, {pipeline_mode = #tpu.pipeline_mode<synchronous>, transform_indices = @transform_1, window_bounds = array<i64: 2, 1, 8>}, {pipeline_mode = #tpu.pipeline_mode<synchronous>, transform_indices = @transform_2, window_bounds = array<i64: 1, 32>}, {pipeline_mode = #tpu.pipeline_mode<synchronous>, transform_indices = @transform_3, window_bounds = array<i64: 1, 32>}, {transform_indices = @transform_4, window_bounds = array<i64: 1, 32, 96>}, {transform_indices = @transform_5, window_bounds = array<i64: 1, 32, 32>}, {transform_indices = @transform_6, window_bounds = array<i64: 1, 32, 64>}, {transform_indices = @transform_7, window_bounds = array<i64: 1, 64, 32>}, {transform_indices = @transform_8, window_bounds = array<i64: 1, 8, 128>}, {pipeline_mode = #tpu.pipeline_mode<synchronous>, transform_indices = @transform_9, window_bounds = array<i64: 32, 32>}, {pipeline_mode = #tpu.pipeline_mode<synchronous>, transform_indices = @transform_10, window_bounds = array<i64: 1, 32>}, {pipeline_mode = #tpu.pipeline_mode<synchronous>, transform_indices = @transform_11, window_bounds = array<i64: 32, 128>}, {pipeline_mode = #tpu.pipeline_mode<synchronous>, transform_indices = @transform_12, window_bounds = array<i64: 1, 128>}, {pipeline_mode = #tpu.pipeline_mode<synchronous>, transform_indices = @transform_13, window_bounds = array<i64: 2, 128>}]} {
    %c0_i32 = arith.constant 0 : i32
    %0 = arith.cmpi eq, %arg0, %c0_i32 : i32
    %1 = arith.extui %0 : i1 to i32
    %c0_i32_0 = arith.constant 0 : i32
    %2 = arith.cmpi ne, %1, %c0_i32_0 : i32
    scf.if %2 {
      %c0_56 = arith.constant 0 : index
      %c0_57 = arith.constant 0 : index
      %194 = vector.load %arg1[%c0_56, %c0_57] : memref<16x32xf32, #tpu.memory_space<vmem>>, vector<16x32xf32>
      %c0_58 = arith.constant 0 : index
      %c0_59 = arith.constant 0 : index
      %195 = vector.load %arg3[%c0_58, %c0_59] : memref<1x32xf32, #tpu.memory_space<vmem>>, vector<1x32xf32>
      %c0_60 = arith.constant 0 : index
      %c0_61 = arith.constant 0 : index
      %196 = vector.load %arg4[%c0_60, %c0_61] : memref<1x32xf32, #tpu.memory_space<vmem>>, vector<1x32xf32>
      %cst_62 = arith.constant dense<0.000000e+00> : vector<16xf32>
      %197 = vector.multi_reduction <add>, %194, %cst_62 [1] : vector<16x32xf32> to vector<16xf32>
      %198 = vector.shape_cast %197 : vector<16xf32> to vector<16x1xf32>
      %cst_63 = arith.constant 3.200000e+01 : f32
      %199 = vector.broadcast %cst_63 : f32 to vector<16x1xf32>
      %200 = arith.divf %198, %199 : vector<16x1xf32>
      %201 = vector.broadcast %200 : vector<16x1xf32> to vector<16x32xf32>
      %202 = arith.subf %194, %201 : vector<16x32xf32>
      %203 = arith.mulf %202, %202 : vector<16x32xf32>
      %cst_64 = arith.constant dense<0.000000e+00> : vector<16xf32>
      %204 = vector.multi_reduction <add>, %203, %cst_64 [1] : vector<16x32xf32> to vector<16xf32>
      %205 = vector.shape_cast %204 : vector<16xf32> to vector<16x1xf32>
      %cst_65 = arith.constant 3.200000e+01 : f32
      %206 = vector.broadcast %cst_65 : f32 to vector<16x1xf32>
      %207 = arith.divf %205, %206 : vector<16x1xf32>
      %208 = vector.broadcast %200 : vector<16x1xf32> to vector<16x32xf32>
      %209 = arith.subf %194, %208 : vector<16x32xf32>
      %cst_66 = arith.constant 9.99999996E-13 : f32
      %210 = vector.broadcast %cst_66 : f32 to vector<16x1xf32>
      %211 = arith.addf %207, %210 : vector<16x1xf32>
      %212 = math.rsqrt %211 : vector<16x1xf32>
      %213 = vector.broadcast %212 : vector<16x1xf32> to vector<16x32xf32>
      %214 = arith.mulf %209, %213 : vector<16x32xf32>
      %215 = vector.broadcast %195 : vector<1x32xf32> to vector<16x32xf32>
      %216 = arith.mulf %214, %215 : vector<16x32xf32>
      %217 = vector.broadcast %196 : vector<1x32xf32> to vector<16x32xf32>
      %218 = arith.addf %216, %217 : vector<16x32xf32>
      %c0_67 = arith.constant 0 : index
      %c0_68 = arith.constant 0 : index
      %219 = vector.load %arg15[%c0_67, %c0_68] : memref<16x32xf32, #tpu.memory_space<vmem>>, vector<16x32xf32>
      tpu.vector_store %arg15[%c0_67, %c0_68], %218 {strides = array<i32>} : memref<16x32xf32, #tpu.memory_space<vmem>>, vector<16x32xf32>,
    } else {
    }
    %c0 = arith.constant 0 : index
    %c0_1 = arith.constant 0 : index
    %3 = vector.load %arg15[%c0, %c0_1] : memref<16x32xf32, #tpu.memory_space<vmem>>, vector<16x32xf32>
    %c0_2 = arith.constant 0 : index
    %c0_3 = arith.constant 0 : index
    %c0_4 = arith.constant 0 : index
    %4 = vector.load %arg9[%c0_2, %c0_3, %c0_4] : memref<1x8x128xf32, #tpu.memory_space<vmem>>, vector<1x8x128xf32>
    %5 = vector.shape_cast %4 : vector<1x8x128xf32> to vector<8x128xf32>
    %6 = vector.extract_strided_slice %5 {offsets = [0, 0], sizes = [1, 96], strides = [1, 1]} : vector<8x128xf32> to vector<1x96xf32>
    %7 = vector.extract_strided_slice %5 {offsets = [1, 0], sizes = [1, 32], strides = [1, 1]} : vector<8x128xf32> to vector<1x32xf32>
    %8 = vector.extract_strided_slice %5 {offsets = [2, 0], sizes = [1, 64], strides = [1, 1]} : vector<8x128xf32> to vector<1x64xf32>
    %9 = vector.extract_strided_slice %5 {offsets = [3, 0], sizes = [1, 32], strides = [1, 1]} : vector<8x128xf32> to vector<1x32xf32>
    %10 = vector.extract_strided_slice %5 {offsets = [4, 0], sizes = [1, 32], strides = [1, 1]} : vector<8x128xf32> to vector<1x32xf32>
    %11 = vector.extract_strided_slice %5 {offsets = [5, 0], sizes = [1, 32], strides = [1, 1]} : vector<8x128xf32> to vector<1x32xf32>
    %12 = vector.extract_strided_slice %5 {offsets = [6, 0], sizes = [1, 32], strides = [1, 1]} : vector<8x128xf32> to vector<1x32xf32>
    %13 = vector.extract_strided_slice %5 {offsets = [7, 0], sizes = [1, 32], strides = [1, 1]} : vector<8x128xf32> to vector<1x32xf32>
    %14 = arith.truncf %3 : vector<16x32xf32> to vector<16x32xbf16>
    %c0_5 = arith.constant 0 : index
    %c0_6 = arith.constant 0 : index
    %c0_7 = arith.constant 0 : index
    %15 = vector.load %arg5[%c0_5, %c0_6, %c0_7] : memref<1x32x96xbf16, #tpu.memory_space<vmem>>, vector<1x32x96xbf16>
    %16 = vector.shape_cast %15 : vector<1x32x96xbf16> to vector<32x96xbf16>
    %cst = arith.constant dense<0.000000e+00> : vector<16x96xf32>
    %17 = tpu.matmul %14, %16, %cst {dimension_numbers = #tpu.dot_dimension_numbers<[1], [0], [0], [1], [0, 0, 1, 1], [], []>} : vector<16x32xbf16>, vector<32x96xbf16>, vector<16x96xf32> -> vector<16x96xf32>
    %18 = vector.broadcast %6 : vector<1x96xf32> to vector<16x96xf32>
    %19 = arith.addf %17, %18 : vector<16x96xf32>
    %20 = vector.extract_strided_slice %19 {offsets = [0, 0], sizes = [16, 32], strides = [1, 1]} : vector<16x96xf32> to vector<16x32xf32>
    %21 = vector.shape_cast %20 : vector<16x32xf32> to vector<2x8x32xf32>
    %22 = vector.extract_strided_slice %19 {offsets = [0, 32], sizes = [16, 32], strides = [1, 1]} : vector<16x96xf32> to vector<16x32xf32>
    %23 = vector.shape_cast %22 : vector<16x32xf32> to vector<2x8x32xf32>
    %24 = vector.extract_strided_slice %19 {offsets = [0, 64], sizes = [16, 32], strides = [1, 1]} : vector<16x96xf32> to vector<16x32xf32>
    %25 = vector.shape_cast %24 : vector<16x32xf32> to vector<2x8x32xf32>
    %c0_8 = arith.constant 0 : index
    %c0_9 = arith.constant 0 : index
    %c0_10 = arith.constant 0 : index
    %26 = vector.load %arg2[%c0_8, %c0_9, %c0_10] : memref<2x1x8xf32, #tpu.memory_space<vmem>>, vector<2x1x8xf32>
    %27 = vector.extract_strided_slice %21 {offsets = [0, 0, 0], sizes = [2, 8, 8], strides = [1, 1, 1]} : vector<2x8x32xf32> to vector<2x8x8xf32>
    %28 = arith.truncf %27 : vector<2x8x8xf32> to vector<2x8x8xbf16>
    %29 = vector.extract_strided_slice %23 {offsets = [0, 0, 0], sizes = [2, 8, 8], strides = [1, 1, 1]} : vector<2x8x32xf32> to vector<2x8x8xf32>
    %30 = arith.truncf %29 : vector<2x8x8xf32> to vector<2x8x8xbf16>
    %31 = vector.extract_strided_slice %25 {offsets = [0, 0, 0], sizes = [2, 8, 8], strides = [1, 1, 1]} : vector<2x8x32xf32> to vector<2x8x8xf32>
    %32 = arith.truncf %31 : vector<2x8x8xf32> to vector<2x8x8xbf16>
    "tpu.trace_start"() <{level = 10 : i32, message = "bqd,bkd->bqk"}> : () -> ()
    %cst_11 = arith.constant dense<0.000000e+00> : vector<2x8x8xf32>
    %33 = tpu.matmul %28, %30, %cst_11 {dimension_numbers = #tpu.dot_dimension_numbers<[2], [2], [1], [1], [0, 0, 0, 1, 1, 1], [0], [0]>} : vector<2x8x8xbf16>, vector<2x8x8xbf16>, vector<2x8x8xf32> -> vector<2x8x8xf32>
    "tpu.trace_stop"() : () -> ()
    %34 = vector.broadcast %26 : vector<2x1x8xf32> to vector<2x8x8xf32>
    %35 = arith.addf %33, %34 : vector<2x8x8xf32>
    %cst_12 = arith.constant dense<0xFF800000> : vector<2x8xf32>
    %36 = vector.multi_reduction <maximumf>, %35, %cst_12 [2] : vector<2x8x8xf32> to vector<2x8xf32>
    %37 = vector.shape_cast %36 : vector<2x8xf32> to vector<2x8x1xf32>
    %38 = vector.broadcast %37 : vector<2x8x1xf32> to vector<2x8x8xf32>
    %39 = arith.subf %35, %38 : vector<2x8x8xf32>
    %40 = math.exp %39 : vector<2x8x8xf32>
    %cst_13 = arith.constant dense<0.000000e+00> : vector<2x8xf32>
    %41 = vector.multi_reduction <add>, %40, %cst_13 [2] : vector<2x8x8xf32> to vector<2x8xf32>
    %42 = vector.shape_cast %41 : vector<2x8xf32> to vector<2x8x1xf32>
    %43 = tpu.reciprocal %42 {approx = true} : vector<2x8x1xf32> -> vector<2x8x1xf32>
    %44 = vector.broadcast %43 : vector<2x8x1xf32> to vector<2x8x8xf32>
    %45 = arith.mulf %40, %44 : vector<2x8x8xf32>
    %46 = arith.truncf %45 : vector<2x8x8xf32> to vector<2x8x8xbf16>
    "tpu.trace_start"() <{level = 10 : i32, message = "bqk,bkd->bqd"}> : () -> ()
    %cst_14 = arith.constant dense<0.000000e+00> : vector<2x8x8xf32>
    %47 = tpu.matmul %46, %32, %cst_14 {dimension_numbers = #tpu.dot_dimension_numbers<[2], [1], [1], [2], [0, 0, 0, 1, 1, 2], [0], [0]>} : vector<2x8x8xbf16>, vector<2x8x8xbf16>, vector<2x8x8xf32> -> vector<2x8x8xf32>
    "tpu.trace_stop"() : () -> ()
    %48 = vector.extract_strided_slice %21 {offsets = [0, 0, 8], sizes = [2, 8, 8], strides = [1, 1, 1]} : vector<2x8x32xf32> to vector<2x8x8xf32>
    %49 = arith.truncf %48 : vector<2x8x8xf32> to vector<2x8x8xbf16>
    %50 = vector.extract_strided_slice %23 {offsets = [0, 0, 8], sizes = [2, 8, 8], strides = [1, 1, 1]} : vector<2x8x32xf32> to vector<2x8x8xf32>
    %51 = arith.truncf %50 : vector<2x8x8xf32> to vector<2x8x8xbf16>
    %52 = vector.extract_strided_slice %25 {offsets = [0, 0, 8], sizes = [2, 8, 8], strides = [1, 1, 1]} : vector<2x8x32xf32> to vector<2x8x8xf32>
    %53 = arith.truncf %52 : vector<2x8x8xf32> to vector<2x8x8xbf16>
    "tpu.trace_start"() <{level = 10 : i32, message = "bqd,bkd->bqk"}> : () -> ()
    %cst_15 = arith.constant dense<0.000000e+00> : vector<2x8x8xf32>
    %54 = tpu.matmul %49, %51, %cst_15 {dimension_numbers = #tpu.dot_dimension_numbers<[2], [2], [1], [1], [0, 0, 0, 1, 1, 1], [0], [0]>} : vector<2x8x8xbf16>, vector<2x8x8xbf16>, vector<2x8x8xf32> -> vector<2x8x8xf32>
    "tpu.trace_stop"() : () -> ()
    %55 = vector.broadcast %26 : vector<2x1x8xf32> to vector<2x8x8xf32>
    %56 = arith.addf %54, %55 : vector<2x8x8xf32>
    %cst_16 = arith.constant dense<0xFF800000> : vector<2x8xf32>
    %57 = vector.multi_reduction <maximumf>, %56, %cst_16 [2] : vector<2x8x8xf32> to vector<2x8xf32>
    %58 = vector.shape_cast %57 : vector<2x8xf32> to vector<2x8x1xf32>
    %59 = vector.broadcast %58 : vector<2x8x1xf32> to vector<2x8x8xf32>
    %60 = arith.subf %56, %59 : vector<2x8x8xf32>
    %61 = math.exp %60 : vector<2x8x8xf32>
    %cst_17 = arith.constant dense<0.000000e+00> : vector<2x8xf32>
    %62 = vector.multi_reduction <add>, %61, %cst_17 [2] : vector<2x8x8xf32> to vector<2x8xf32>
    %63 = vector.shape_cast %62 : vector<2x8xf32> to vector<2x8x1xf32>
    %64 = tpu.reciprocal %63 {approx = true} : vector<2x8x1xf32> -> vector<2x8x1xf32>
    %65 = vector.broadcast %64 : vector<2x8x1xf32> to vector<2x8x8xf32>
    %66 = arith.mulf %61, %65 : vector<2x8x8xf32>
    %67 = arith.truncf %66 : vector<2x8x8xf32> to vector<2x8x8xbf16>
    "tpu.trace_start"() <{level = 10 : i32, message = "bqk,bkd->bqd"}> : () -> ()
    %cst_18 = arith.constant dense<0.000000e+00> : vector<2x8x8xf32>
    %68 = tpu.matmul %67, %53, %cst_18 {dimension_numbers = #tpu.dot_dimension_numbers<[2], [1], [1], [2], [0, 0, 0, 1, 1, 2], [0], [0]>} : vector<2x8x8xbf16>, vector<2x8x8xbf16>, vector<2x8x8xf32> -> vector<2x8x8xf32>
    "tpu.trace_stop"() : () -> ()
    %69 = vector.extract_strided_slice %21 {offsets = [0, 0, 16], sizes = [2, 8, 8], strides = [1, 1, 1]} : vector<2x8x32xf32> to vector<2x8x8xf32>
    %70 = arith.truncf %69 : vector<2x8x8xf32> to vector<2x8x8xbf16>
    %71 = vector.extract_strided_slice %23 {offsets = [0, 0, 16], sizes = [2, 8, 8], strides = [1, 1, 1]} : vector<2x8x32xf32> to vector<2x8x8xf32>
    %72 = arith.truncf %71 : vector<2x8x8xf32> to vector<2x8x8xbf16>
    %73 = vector.extract_strided_slice %25 {offsets = [0, 0, 16], sizes = [2, 8, 8], strides = [1, 1, 1]} : vector<2x8x32xf32> to vector<2x8x8xf32>
    %74 = arith.truncf %73 : vector<2x8x8xf32> to vector<2x8x8xbf16>
    "tpu.trace_start"() <{level = 10 : i32, message = "bqd,bkd->bqk"}> : () -> ()
    %cst_19 = arith.constant dense<0.000000e+00> : vector<2x8x8xf32>
    %75 = tpu.matmul %70, %72, %cst_19 {dimension_numbers = #tpu.dot_dimension_numbers<[2], [2], [1], [1], [0, 0, 0, 1, 1, 1], [0], [0]>} : vector<2x8x8xbf16>, vector<2x8x8xbf16>, vector<2x8x8xf32> -> vector<2x8x8xf32>
    "tpu.trace_stop"() : () -> ()
    %76 = vector.broadcast %26 : vector<2x1x8xf32> to vector<2x8x8xf32>
    %77 = arith.addf %75, %76 : vector<2x8x8xf32>
    %cst_20 = arith.constant dense<0xFF800000> : vector<2x8xf32>
    %78 = vector.multi_reduction <maximumf>, %77, %cst_20 [2] : vector<2x8x8xf32> to vector<2x8xf32>
    %79 = vector.shape_cast %78 : vector<2x8xf32> to vector<2x8x1xf32>
    %80 = vector.broadcast %79 : vector<2x8x1xf32> to vector<2x8x8xf32>
    %81 = arith.subf %77, %80 : vector<2x8x8xf32>
    %82 = math.exp %81 : vector<2x8x8xf32>
    %cst_21 = arith.constant dense<0.000000e+00> : vector<2x8xf32>
    %83 = vector.multi_reduction <add>, %82, %cst_21 [2] : vector<2x8x8xf32> to vector<2x8xf32>
    %84 = vector.shape_cast %83 : vector<2x8xf32> to vector<2x8x1xf32>
    %85 = tpu.reciprocal %84 {approx = true} : vector<2x8x1xf32> -> vector<2x8x1xf32>
    %86 = vector.broadcast %85 : vector<2x8x1xf32> to vector<2x8x8xf32>
    %87 = arith.mulf %82, %86 : vector<2x8x8xf32>
    %88 = arith.truncf %87 : vector<2x8x8xf32> to vector<2x8x8xbf16>
    "tpu.trace_start"() <{level = 10 : i32, message = "bqk,bkd->bqd"}> : () -> ()
    %cst_22 = arith.constant dense<0.000000e+00> : vector<2x8x8xf32>
    %89 = tpu.matmul %88, %74, %cst_22 {dimension_numbers = #tpu.dot_dimension_numbers<[2], [1], [1], [2], [0, 0, 0, 1, 1, 2], [0], [0]>} : vector<2x8x8xbf16>, vector<2x8x8xbf16>, vector<2x8x8xf32> -> vector<2x8x8xf32>
    "tpu.trace_stop"() : () -> ()
    %90 = vector.extract_strided_slice %21 {offsets = [0, 0, 24], sizes = [2, 8, 8], strides = [1, 1, 1]} : vector<2x8x32xf32> to vector<2x8x8xf32>
    %91 = arith.truncf %90 : vector<2x8x8xf32> to vector<2x8x8xbf16>
    %92 = vector.extract_strided_slice %23 {offsets = [0, 0, 24], sizes = [2, 8, 8], strides = [1, 1, 1]} : vector<2x8x32xf32> to vector<2x8x8xf32>
    %93 = arith.truncf %92 : vector<2x8x8xf32> to vector<2x8x8xbf16>
    %94 = vector.extract_strided_slice %25 {offsets = [0, 0, 24], sizes = [2, 8, 8], strides = [1, 1, 1]} : vector<2x8x32xf32> to vector<2x8x8xf32>
    %95 = arith.truncf %94 : vector<2x8x8xf32> to vector<2x8x8xbf16>
    "tpu.trace_start"() <{level = 10 : i32, message = "bqd,bkd->bqk"}> : () -> ()
    %cst_23 = arith.constant dense<0.000000e+00> : vector<2x8x8xf32>
    %96 = tpu.matmul %91, %93, %cst_23 {dimension_numbers = #tpu.dot_dimension_numbers<[2], [2], [1], [1], [0, 0, 0, 1, 1, 1], [0], [0]>} : vector<2x8x8xbf16>, vector<2x8x8xbf16>, vector<2x8x8xf32> -> vector<2x8x8xf32>
    "tpu.trace_stop"() : () -> ()
    %97 = vector.broadcast %26 : vector<2x1x8xf32> to vector<2x8x8xf32>
    %98 = arith.addf %96, %97 : vector<2x8x8xf32>
    %cst_24 = arith.constant dense<0xFF800000> : vector<2x8xf32>
    %99 = vector.multi_reduction <maximumf>, %98, %cst_24 [2] : vector<2x8x8xf32> to vector<2x8xf32>
    %100 = vector.shape_cast %99 : vector<2x8xf32> to vector<2x8x1xf32>
    %101 = vector.broadcast %100 : vector<2x8x1xf32> to vector<2x8x8xf32>
    %102 = arith.subf %98, %101 : vector<2x8x8xf32>
    %103 = math.exp %102 : vector<2x8x8xf32>
    %cst_25 = arith.constant dense<0.000000e+00> : vector<2x8xf32>
    %104 = vector.multi_reduction <add>, %103, %cst_25 [2] : vector<2x8x8xf32> to vector<2x8xf32>
    %105 = vector.shape_cast %104 : vector<2x8xf32> to vector<2x8x1xf32>
    %106 = tpu.reciprocal %105 {approx = true} : vector<2x8x1xf32> -> vector<2x8x1xf32>
    %107 = vector.broadcast %106 : vector<2x8x1xf32> to vector<2x8x8xf32>
    %108 = arith.mulf %103, %107 : vector<2x8x8xf32>
    %109 = arith.truncf %108 : vector<2x8x8xf32> to vector<2x8x8xbf16>
    "tpu.trace_start"() <{level = 10 : i32, message = "bqk,bkd->bqd"}> : () -> ()
    %cst_26 = arith.constant dense<0.000000e+00> : vector<2x8x8xf32>
    %110 = tpu.matmul %109, %95, %cst_26 {dimension_numbers = #tpu.dot_dimension_numbers<[2], [1], [1], [2], [0, 0, 0, 1, 1, 2], [0], [0]>} : vector<2x8x8xbf16>, vector<2x8x8xbf16>, vector<2x8x8xf32> -> vector<2x8x8xf32>
    "tpu.trace_stop"() : () -> ()
    %111 = tpu.concatenate %47, %68, %89, %110 in 2 : vector<2x8x8xf32>, vector<2x8x8xf32>, vector<2x8x8xf32>, vector<2x8x8xf32> -> vector<2x8x32xf32>
    %112 = vector.shape_cast %111 : vector<2x8x32xf32> to vector<16x32xf32>
    %113 = arith.truncf %112 : vector<16x32xf32> to vector<16x32xbf16>
    %c0_27 = arith.constant 0 : index
    %c0_28 = arith.constant 0 : index
    %c0_29 = arith.constant 0 : index
    %114 = vector.load %arg6[%c0_27, %c0_28, %c0_29] : memref<1x32x32xbf16, #tpu.memory_space<vmem>>, vector<1x32x32xbf16>
    %115 = vector.shape_cast %114 : vector<1x32x32xbf16> to vector<32x32xbf16>
    %cst_30 = arith.constant dense<0.000000e+00> : vector<16x32xf32>
    %116 = tpu.matmul %113, %115, %cst_30 {dimension_numbers = #tpu.dot_dimension_numbers<[1], [0], [0], [1], [0, 0, 1, 1], [], []>} : vector<16x32xbf16>, vector<32x32xbf16>, vector<16x32xf32> -> vector<16x32xf32>
    %117 = vector.broadcast %7 : vector<1x32xf32> to vector<16x32xf32>
    %118 = arith.addf %116, %117 : vector<16x32xf32>
    %119 = arith.addf %3, %118 : vector<16x32xf32>
    %cst_31 = arith.constant dense<0.000000e+00> : vector<16xf32>
    %120 = vector.multi_reduction <add>, %119, %cst_31 [1] : vector<16x32xf32> to vector<16xf32>
    %121 = vector.shape_cast %120 : vector<16xf32> to vector<16x1xf32>
    %cst_32 = arith.constant 3.200000e+01 : f32
    %122 = vector.broadcast %cst_32 : f32 to vector<16x1xf32>
    %123 = arith.divf %121, %122 : vector<16x1xf32>
    %124 = vector.broadcast %123 : vector<16x1xf32> to vector<16x32xf32>
    %125 = arith.subf %119, %124 : vector<16x32xf32>
    %126 = arith.mulf %125, %125 : vector<16x32xf32>
    %cst_33 = arith.constant dense<0.000000e+00> : vector<16xf32>
    %127 = vector.multi_reduction <add>, %126, %cst_33 [1] : vector<16x32xf32> to vector<16xf32>
    %128 = vector.shape_cast %127 : vector<16xf32> to vector<16x1xf32>
    %cst_34 = arith.constant 3.200000e+01 : f32
    %129 = vector.broadcast %cst_34 : f32 to vector<16x1xf32>
    %130 = arith.divf %128, %129 : vector<16x1xf32>
    %131 = vector.broadcast %123 : vector<16x1xf32> to vector<16x32xf32>
    %132 = arith.subf %119, %131 : vector<16x32xf32>
    %cst_35 = arith.constant 9.99999996E-13 : f32
    %133 = vector.broadcast %cst_35 : f32 to vector<16x1xf32>
    %134 = arith.addf %130, %133 : vector<16x1xf32>
    %135 = math.rsqrt %134 : vector<16x1xf32>
    %136 = vector.broadcast %135 : vector<16x1xf32> to vector<16x32xf32>
    %137 = arith.mulf %132, %136 : vector<16x32xf32>
    %138 = vector.broadcast %10 : vector<1x32xf32> to vector<16x32xf32>
    %139 = arith.mulf %137, %138 : vector<16x32xf32>
    %140 = vector.broadcast %11 : vector<1x32xf32> to vector<16x32xf32>
    %141 = arith.addf %139, %140 : vector<16x32xf32>
    %142 = arith.truncf %141 : vector<16x32xf32> to vector<16x32xbf16>
    %c0_36 = arith.constant 0 : index
    %c0_37 = arith.constant 0 : index
    %c0_38 = arith.constant 0 : index
    %143 = vector.load %arg7[%c0_36, %c0_37, %c0_38] : memref<1x32x64xbf16, #tpu.memory_space<vmem>>, vector<1x32x64xbf16>
    %144 = vector.shape_cast %143 : vector<1x32x64xbf16> to vector<32x64xbf16>
    %cst_39 = arith.constant dense<0.000000e+00> : vector<16x64xf32>
    %145 = tpu.matmul %142, %144, %cst_39 {dimension_numbers = #tpu.dot_dimension_numbers<[1], [0], [0], [1], [0, 0, 1, 1], [], []>} : vector<16x32xbf16>, vector<32x64xbf16>, vector<16x64xf32> -> vector<16x64xf32>
    %146 = vector.broadcast %8 : vector<1x64xf32> to vector<16x64xf32>
    %147 = arith.addf %145, %146 : vector<16x64xf32>
    %148 = arith.mulf %147, %147 : vector<16x64xf32>
    %149 = arith.mulf %147, %148 : vector<16x64xf32>
    %cst_40 = arith.constant 4.471500e-02 : f32
    %150 = vector.broadcast %cst_40 : f32 to vector<16x64xf32>
    %151 = arith.mulf %150, %149 : vector<16x64xf32>
    %152 = arith.addf %147, %151 : vector<16x64xf32>
    %cst_41 = arith.constant 0.797884583 : f32
    %153 = vector.broadcast %cst_41 : f32 to vector<16x64xf32>
    %154 = arith.mulf %153, %152 : vector<16x64xf32>
    %155 = math.tanh %154 : vector<16x64xf32>
    %cst_42 = arith.constant 1.000000e+00 : f32
    %156 = vector.broadcast %cst_42 : f32 to vector<16x64xf32>
    %157 = arith.addf %156, %155 : vector<16x64xf32>
    %cst_43 = arith.constant 5.000000e-01 : f32
    %158 = vector.broadcast %cst_43 : f32 to vector<16x64xf32>
    %159 = arith.mulf %158, %157 : vector<16x64xf32>
    %160 = arith.mulf %147, %159 : vector<16x64xf32>
    %161 = arith.truncf %160 : vector<16x64xf32> to vector<16x64xbf16>
    %c0_44 = arith.constant 0 : index
    %c0_45 = arith.constant 0 : index
    %c0_46 = arith.constant 0 : index
    %162 = vector.load %arg8[%c0_44, %c0_45, %c0_46] : memref<1x64x32xbf16, #tpu.memory_space<vmem>>, vector<1x64x32xbf16>
    %163 = vector.shape_cast %162 : vector<1x64x32xbf16> to vector<64x32xbf16>
    %cst_47 = arith.constant dense<0.000000e+00> : vector<16x32xf32>
    %164 = tpu.matmul %161, %163, %cst_47 {dimension_numbers = #tpu.dot_dimension_numbers<[1], [0], [0], [1], [0, 0, 1, 1], [], []>} : vector<16x64xbf16>, vector<64x32xbf16>, vector<16x32xf32> -> vector<16x32xf32>
    %165 = vector.broadcast %9 : vector<1x32xf32> to vector<16x32xf32>
    %166 = arith.addf %164, %165 : vector<16x32xf32>
    %167 = arith.addf %141, %166 : vector<16x32xf32>
    %cst_48 = arith.constant dense<0.000000e+00> : vector<16xf32>
    %168 = vector.multi_reduction <add>, %167, %cst_48 [1] : vector<16x32xf32> to vector<16xf32>
    %169 = vector.shape_cast %168 : vector<16xf32> to vector<16x1xf32>
    %cst_49 = arith.constant 3.200000e+01 : f32
    %170 = vector.broadcast %cst_49 : f32 to vector<16x1xf32>
    %171 = arith.divf %169, %170 : vector<16x1xf32>
    %172 = vector.broadcast %171 : vector<16x1xf32> to vector<16x32xf32>
    %173 = arith.subf %167, %172 : vector<16x32xf32>
    %174 = arith.mulf %173, %173 : vector<16x32xf32>
    %cst_50 = arith.constant dense<0.000000e+00> : vector<16xf32>
    %175 = vector.multi_reduction <add>, %174, %cst_50 [1] : vector<16x32xf32> to vector<16xf32>
    %176 = vector.shape_cast %175 : vector<16xf32> to vector<16x1xf32>
    %cst_51 = arith.constant 3.200000e+01 : f32
    %177 = vector.broadcast %cst_51 : f32 to vector<16x1xf32>
    %178 = arith.divf %176, %177 : vector<16x1xf32>
    %179 = vector.broadcast %171 : vector<16x1xf32> to vector<16x32xf32>
    %180 = arith.subf %167, %179 : vector<16x32xf32>
    %cst_52 = arith.constant 9.99999996E-13 : f32
    %181 = vector.broadcast %cst_52 : f32 to vector<16x1xf32>
    %182 = arith.addf %178, %181 : vector<16x1xf32>
    %183 = math.rsqrt %182 : vector<16x1xf32>
    %184 = vector.broadcast %183 : vector<16x1xf32> to vector<16x32xf32>
    %185 = arith.mulf %180, %184 : vector<16x32xf32>
    %186 = vector.broadcast %12 : vector<1x32xf32> to vector<16x32xf32>
    %187 = arith.mulf %185, %186 : vector<16x32xf32>
    %188 = vector.broadcast %13 : vector<1x32xf32> to vector<16x32xf32>
    %189 = arith.addf %187, %188 : vector<16x32xf32>
    %c0_53 = arith.constant 0 : index
    %c0_54 = arith.constant 0 : index
    %190 = vector.load %arg15[%c0_53, %c0_54] : memref<16x32xf32, #tpu.memory_space<vmem>>, vector<16x32xf32>
    tpu.vector_store %arg15[%c0_53, %c0_54], %189 {strides = array<i32>} : memref<16x32xf32, #tpu.memory_space<vmem>>, vector<16x32xf32>,
    %c1_i32 = arith.constant 1 : i32
    %191 = arith.cmpi eq, %arg0, %c1_i32 : i32
    %192 = arith.extui %191 : i1 to i32
    %c0_i32_55 = arith.constant 0 : i32
    %193 = arith.cmpi ne, %192, %c0_i32_55 : i32
    scf.if %193 {
      %194 = vector.extract_strided_slice %189 {offsets = [0, 0], sizes = [1, 32], strides = [1, 1]} : vector<16x32xf32> to vector<1x32xf32>
      %195 = vector.extract_strided_slice %189 {offsets = [8, 0], sizes = [1, 32], strides = [1, 1]} : vector<16x32xf32> to vector<1x32xf32>
      %196 = tpu.concatenate %194, %195 in 0 : vector<1x32xf32>, vector<1x32xf32> -> vector<2x32xf32>
      %197 = arith.truncf %196 : vector<2x32xf32> to vector<2x32xbf16>
      %c0_56 = arith.constant 0 : index
      %c0_57 = arith.constant 0 : index
      %198 = vector.load %arg10[%c0_56, %c0_57] : memref<32x32xbf16, #tpu.memory_space<vmem>>, vector<32x32xbf16>
      %cst_58 = arith.constant dense<0.000000e+00> : vector<2x32xf32>
      %199 = tpu.matmul %197, %198, %cst_58 {dimension_numbers = #tpu.dot_dimension_numbers<[1], [0], [0], [1], [0, 0, 1, 1], [], []>} : vector<2x32xbf16>, vector<32x32xbf16>, vector<2x32xf32> -> vector<2x32xf32>
      %c0_59 = arith.constant 0 : index
      %c0_60 = arith.constant 0 : index
      %200 = vector.load %arg11[%c0_59, %c0_60] : memref<1x32xf32, #tpu.memory_space<vmem>>, vector<1x32xf32>
      %201 = vector.broadcast %200 : vector<1x32xf32> to vector<2x32xf32>
      %202 = arith.addf %199, %201 : vector<2x32xf32>
      %203 = math.tanh %202 : vector<2x32xf32>
      %204 = arith.truncf %203 : vector<2x32xf32> to vector<2x32xbf16>
      %c0_61 = arith.constant 0 : index
      %c0_62 = arith.constant 0 : index
      %205 = vector.load %arg12[%c0_61, %c0_62] : memref<32x128xbf16, #tpu.memory_space<vmem>>, vector<32x128xbf16>
      %cst_63 = arith.constant dense<0.000000e+00> : vector<2x128xf32>
      %206 = tpu.matmul %204, %205, %cst_63 {dimension_numbers = #tpu.dot_dimension_numbers<[1], [0], [0], [1], [0, 0, 1, 1], [], []>} : vector<2x32xbf16>, vector<32x128xbf16>, vector<2x128xf32> -> vector<2x128xf32>
      %c0_64 = arith.constant 0 : index
      %c0_65 = arith.constant 0 : index
      %207 = vector.load %arg13[%c0_64, %c0_65] : memref<1x128xf32, #tpu.memory_space<vmem>>, vector<1x128xf32>
      %208 = vector.broadcast %207 : vector<1x128xf32> to vector<2x128xf32>
      %209 = arith.addf %206, %208 : vector<2x128xf32>
      %c0_66 = arith.constant 0 : index
      %c0_67 = arith.constant 0 : index
      %210 = vector.load %arg14[%c0_66, %c0_67] : memref<2x128xf32, #tpu.memory_space<vmem>>, vector<2x128xf32>
      tpu.vector_store %arg14[%c0_66, %c0_67], %209 {strides = array<i32>} : memref<2x128xf32, #tpu.memory_space<vmem>>, vector<2x128xf32>,
    } else {
    }
    return
  }
  func.func @transform_0(%arg0: i32) -> (i32, i32) {
    %c0_i32 = arith.constant 0 : i32
    %c0_i32_0 = arith.constant 0 : i32
    %c0_i32_1 = arith.constant 0 : i32
    return %c0_i32, %c0_i32_0 : i32, i32
  }
  func.func @transform_1(%arg0: i32) -> (i32, i32, i32) {
    %c0_i32 = arith.constant 0 : i32
    %c0_i32_0 = arith.constant 0 : i32
    %c0_i32_1 = arith.constant 0 : i32
    %c0_i32_2 = arith.constant 0 : i32
    return %c0_i32, %c0_i32_0, %c0_i32_1 : i32, i32, i32
  }
  func.func @transform_2(%arg0: i32) -> (i32, i32) {
    %c0_i32 = arith.constant 0 : i32
    %c0_i32_0 = arith.constant 0 : i32
    %c0_i32_1 = arith.constant 0 : i32
    return %c0_i32, %c0_i32_0 : i32, i32
  }
  func.func @transform_3(%arg0: i32) -> (i32, i32) {
    %c0_i32 = arith.constant 0 : i32
    %c0_i32_0 = arith.constant 0 : i32
    %c0_i32_1 = arith.constant 0 : i32
    return %c0_i32, %c0_i32_0 : i32, i32
  }
  func.func @transform_4(%arg0: i32) -> (i32, i32, i32) {
    %c0_i32 = arith.constant 0 : i32
    %c0_i32_0 = arith.constant 0 : i32
    %c0_i32_1 = arith.constant 0 : i32
    return %arg0, %c0_i32, %c0_i32_0 : i32, i32, i32
  }
  func.func @transform_5(%arg0: i32) -> (i32, i32, i32) {
    %c0_i32 = arith.constant 0 : i32
    %c0_i32_0 = arith.constant 0 : i32
    %c0_i32_1 = arith.constant 0 : i32
    return %arg0, %c0_i32, %c0_i32_0 : i32, i32, i32
  }
  func.func @transform_6(%arg0: i32) -> (i32, i32, i32) {
    %c0_i32 = arith.constant 0 : i32
    %c0_i32_0 = arith.constant 0 : i32
    %c0_i32_1 = arith.constant 0 : i32
    return %arg0, %c0_i32, %c0_i32_0 : i32, i32, i32
  }
  func.func @transform_7(%arg0: i32) -> (i32, i32, i32) {
    %c0_i32 = arith.constant 0 : i32
    %c0_i32_0 = arith.constant 0 : i32
    %c0_i32_1 = arith.constant 0 : i32
    return %arg0, %c0_i32, %c0_i32_0 : i32, i32, i32
  }
  func.func @transform_8(%arg0: i32) -> (i32, i32, i32) {
    %c0_i32 = arith.constant 0 : i32
    %c0_i32_0 = arith.constant 0 : i32
    %c0_i32_1 = arith.constant 0 : i32
    return %arg0, %c0_i32, %c0_i32_0 : i32, i32, i32
  }
  func.func @transform_9(%arg0: i32) -> (i32, i32) {
    %c0_i32 = arith.constant 0 : i32
    %c0_i32_0 = arith.constant 0 : i32
    %c0_i32_1 = arith.constant 0 : i32
    return %c0_i32, %c0_i32_0 : i32, i32
  }
  func.func @transform_10(%arg0: i32) -> (i32, i32) {
    %c0_i32 = arith.constant 0 : i32
    %c0_i32_0 = arith.constant 0 : i32
    %c0_i32_1 = arith.constant 0 : i32
    return %c0_i32, %c0_i32_0 : i32, i32
  }
  func.func @transform_11(%arg0: i32) -> (i32, i32) {
    %c0_i32 = arith.constant 0 : i32
    %c0_i32_0 = arith.constant 0 : i32
    %c0_i32_1 = arith.constant 0 : i32
    return %c0_i32, %c0_i32_0 : i32, i32
  }
  func.func @transform_12(%arg0: i32) -> (i32, i32) {
    %c0_i32 = arith.constant 0 : i32
    %c0_i32_0 = arith.constant 0 : i32
    %c0_i32_1 = arith.constant 0 : i32
    return %c0_i32, %c0_i32_0 : i32, i32
  }
  func.func @transform_13(%arg0: i32) -> (i32, i32) {
    %c0_i32 = arith.constant 0 : i32
    %c0_i32_0 = arith.constant 0 : i32
    %c0_i32_1 = arith.constant 0 : i32
    return %c0_i32, %c0_i32_0 : i32, i32
  }
}

</mosaic_0001>

<llo_original>
// kernel: bert_classifier_forward.1
$region0: #{bert_classifier_forward.1}
  #allocation0 [shape = 'u32[]', space=smem, size = 0x4, offset = 0x4, fixed_abs, tag = 'smem constant byte address 0x4 - core index']
  #allocation1 [shape = 'u32[144,128]{1,0:T(1,128)}', space=vmem, size = 0x12000, scoped, tag = 'internal scratch']
  #allocation2 [shape = 'f32[16,32]{1,0:T(8,128)}', space=vmem, size = 0x2000, scoped, tag = 'scratch operand']
  %s0 = inlined_call_operand.vmem [shape: f32[16,32], index: 0, kind: input, shape index: {}]
  %s1 = inlined_call_operand.vmem [shape: f32[2,1,8], index: 1, kind: input, shape index: {}]
  %s2 = inlined_call_operand.vmem [shape: f32[1,32], index: 2, kind: input, shape index: {}]
  %s3 = inlined_call_operand.vmem [shape: f32[1,32], index: 3, kind: input, shape index: {}]
  %s4 = inlined_call_operand.vmem [shape: bf16[2,32,96], index: 4, kind: input, shape index: {}]
  %s5 = inlined_call_operand.vmem [shape: bf16[2,32,32], index: 5, kind: input, shape index: {}]
  %s6 = inlined_call_operand.vmem [shape: bf16[2,32,64], index: 6, kind: input, shape index: {}]
  %s7 = inlined_call_operand.vmem [shape: bf16[2,64,32], index: 7, kind: input, shape index: {}]
  %s8 = inlined_call_operand.vmem [shape: f32[2,8,128], index: 8, kind: input, shape index: {}]
  %s9 = inlined_call_operand.vmem [shape: bf16[32,32], index: 9, kind: input, shape index: {}]
  %s10 = inlined_call_operand.vmem [shape: f32[1,32], index: 10, kind: input, shape index: {}]
  %s11 = inlined_call_operand.vmem [shape: bf16[32,128], index: 11, kind: input, shape index: {}]
  %s12 = inlined_call_operand.vmem [shape: f32[1,128], index: 12, kind: input, shape index: {}]
  %s13 = inlined_call_operand.hbm [shape: f32[2,128], index: 13, kind: output, shape index: {}]
  %s14 = sld [smem:[#allocation0]]
  $region93: #{bert_classifier_forward.1} parent=0
    _
  %s16 = ssub.s32 1, %s14
  %s17 = scalar_select 0, %s16, %s14
  $region1: #{bert_classifier_forward.1} parent=0
    #allocation3 [shape = 'u8[1024]{0}', space=vmem, size = 0x400, scoped, tag = 'output window, operand 0, single buffered']
    #allocation4 [shape = 's32[2]{0}', space=sflag, size = 0x8, scoped, tag = 'scoped memory for bert_classifier_forward.1']
    %18 = vsyncpa [#allocation4], 0
    loop: start=0, step=1, limit=4
    $region2: #{bert_classifier_forward.1} parent=1 // loop_pre_header
      _
    $region3: #{bert_classifier_forward.1} parent=1 // loop_header
      %s20 = sphi 0, %s24
      %p21 = scmp.ge.s32.totalorder %s20, 4
      %s28 = sphi 0, %s28
      %s30 = sphi 0, %s28
      %s31 = sphi 0, %s30
      %s45 = sphi 0, %s31
      %s49 = sphi 0, %s49
      %s51 = sphi 0, %s49
      %s52 = sphi 0, %s51
      %s66 = sphi 0, %s52
      %s70 = sphi 0, %s70
      %s72 = sphi 0, %s70
      %s73 = sphi 0, %s72
      %s87 = sphi 0, %s73
      %s91 = sphi 0, %s91
      %s93 = sphi 0, %s91
      %s94 = sphi 0, %s93
      %s108 = sphi 0, %s94
      %s114 = sphi 0, %s116
      %s117 = sphi 0, %s114
      %s118 = sphi 0, %s117
      %s134 = sphi 0, %s118
      %s140 = sphi 0, %s142
      %s143 = sphi 0, %s140
      %s144 = sphi 0, %s143
      %s160 = sphi 0, %s144
      %s166 = sphi 0, %s168
      %s169 = sphi 0, %s166
      %s170 = sphi 0, %s169
      %s186 = sphi 0, %s170
      %s192 = sphi 0, %s194
      %s195 = sphi 0, %s192
      %s196 = sphi 0, %s195
      %s212 = sphi 0, %s196
      %s218 = sphi 0, %s220
      %s221 = sphi 0, %s218
      %s222 = sphi 0, %s221
      %s238 = sphi 0, %s222
      %s242 = sphi 0, %s242
      %s244 = sphi 0, %s242
      %s245 = sphi 0, %s244
      %s259 = sphi 0, %s245
      %s263 = sphi 0, %s263
      %s265 = sphi 0, %s263
      %s266 = sphi 0, %s265
      %s280 = sphi 0, %s266
      %s284 = sphi 0, %s284
      %s286 = sphi 0, %s284
      %s287 = sphi 0, %s286
      %s301 = sphi 0, %s287
      %s305 = sphi 0, %s305
      %s307 = sphi 0, %s305
      %s308 = sphi 0, %s307
      %s322 = sphi 0, %s308
      %s326 = sphi 0, %s326
      %s328 = sphi 0, %s326
      %s329 = sphi 0, %s328
      %s343 = sphi 0, %s329
    $region4: #{bert_classifier_forward.1} parent=1 // loop_header_branch
      %23 = sbr.rel (%p21) target = $region8
    $region5: #{bert_classifier_forward.1} parent=1 // loop_body
      %s25 = ssub.s32 %s20, 1
      %s26 = ssub.s32 %s20, 2
      %s27 = sadd.s32 %s20, 1
      %s29 = sadd.s32 %s28, 1
      %p32 = scmp.eq.s32.totalorder %s20, 1
      %p33 = scmp.ne.s32.totalorder %s28, %s30
      %p34 = scmp.eq.s32.totalorder %s20, 0
      %p35 = por %p33, %p34
      %p36 = scmp.ne.s32.totalorder %s28, %s30
      %p37 = scmp.eq.s32.totalorder %s25, 1
      %p38 = por %p36, %p37
      %p39 = scmp.ne.s32.totalorder %s30, %s31
      %p40 = scmp.eq.s32.totalorder %s25, 0
      %p41 = por %p39, %p40
      %p42 = scmp.ne.s32.totalorder %s30, %s31
      %p43 = scmp.eq.s32.totalorder %s26, 1
      %p44 = por %p42, %p43
      %p46 = scmp.ne.s32.totalorder %s31, %s45
      %p47 = scmp.eq.s32.totalorder %s26, 0
      %p48 = por %p46, %p47
      %s50 = sadd.s32 %s49, 1
      %p53 = scmp.eq.s32.totalorder %s20, 1
      %p54 = scmp.ne.s32.totalorder %s49, %s51
      %p55 = scmp.eq.s32.totalorder %s20, 0
      %p56 = por %p54, %p55
      %p57 = scmp.ne.s32.totalorder %s49, %s51
      %p58 = scmp.eq.s32.totalorder %s25, 1
      %p59 = por %p57, %p58
      %p60 = scmp.ne.s32.totalorder %s51, %s52
      %p61 = scmp.eq.s32.totalorder %s25, 0
      %p62 = por %p60, %p61
      %p63 = scmp.ne.s32.totalorder %s51, %s52
      %p64 = scmp.eq.s32.totalorder %s26, 1
      %p65 = por %p63, %p64
      %p67 = scmp.ne.s32.totalorder %s52, %s66
      %p68 = scmp.eq.s32.totalorder %s26, 0
      %p69 = por %p67, %p68
      %s71 = sadd.s32 %s70, 1
      %p74 = scmp.eq.s32.totalorder %s20, 1
      %p75 = scmp.ne.s32.totalorder %s70, %s72
      %p76 = scmp.eq.s32.totalorder %s20, 0
      %p77 = por %p75, %p76
      %p78 = scmp.ne.s32.totalorder %s70, %s72
      %p79 = scmp.eq.s32.totalorder %s25, 1
      %p80 = por %p78, %p79
      %p81 = scmp.ne.s32.totalorder %s72, %s73
      %p82 = scmp.eq.s32.totalorder %s25, 0
      %p83 = por %p81, %p82
      %p84 = scmp.ne.s32.totalorder %s72, %s73
      %p85 = scmp.eq.s32.totalorder %s26, 1
      %p86 = por %p84, %p85
      %p88 = scmp.ne.s32.totalorder %s73, %s87
      %p89 = scmp.eq.s32.totalorder %s26, 0
      %p90 = por %p88, %p89
      %s92 = sadd.s32 %s91, 1
      %p95 = scmp.eq.s32.totalorder %s20, 1
      %p96 = scmp.ne.s32.totalorder %s91, %s93
      %p97 = scmp.eq.s32.totalorder %s20, 0
      %p98 = por %p96, %p97
      %p99 = scmp.ne.s32.totalorder %s91, %s93
      %p100 = scmp.eq.s32.totalorder %s25, 1
      %p101 = por %p99, %p100
      %p102 = scmp.ne.s32.totalorder %s93, %s94
      %p103 = scmp.eq.s32.totalorder %s25, 0
      %p104 = por %p102, %p103
      %p105 = scmp.ne.s32.totalorder %s93, %s94
      %p106 = scmp.eq.s32.totalorder %s26, 1
      %p107 = por %p105, %p106
      %p109 = scmp.ne.s32.totalorder %s94, %s108
      %p110 = scmp.eq.s32.totalorder %s26, 0
      %p111 = por %p109, %p110
      %s112 = ssub.s32 %s20, %s27
      %p113 = scmp.eq.s32.totalorder %s112, 0
      %s115 = sadd.s32 %s114, 1
      %s116 = scalar_select %p113, %s114, %s115
      %p119 = pneg %p113
      %p120 = scmp.eq.s32.totalorder %s20, 1
      %p121 = por %p119, %p120
      %p122 = scmp.ne.s32.totalorder %s114, %s117
      %p123 = scmp.eq.s32.totalorder %s20, 0
      %p124 = por %p122, %p123
      %p125 = scmp.ne.s32.totalorder %s114, %s117
      %p126 = scmp.eq.s32.totalorder %s25, 1
      %p127 = por %p125, %p126
      %p128 = scmp.ne.s32.totalorder %s117, %s118
      %p129 = scmp.eq.s32.totalorder %s25, 0
      %p130 = por %p128, %p129
      %p131 = scmp.ne.s32.totalorder %s117, %s118
      %p132 = scmp.eq.s32.totalorder %s26, 1
      %p133 = por %p131, %p132
      %p135 = scmp.ne.s32.totalorder %s118, %s134
      %p136 = scmp.eq.s32.totalorder %s26, 0
      %p137 = por %p135, %p136
      %s138 = ssub.s32 %s20, %s27
      %p139 = scmp.eq.s32.totalorder %s138, 0
      %s141 = sadd.s32 %s140, 1
      %s142 = scalar_select %p139, %s140, %s141
      %p145 = pneg %p139
      %p146 = scmp.eq.s32.totalorder %s20, 1
      %p147 = por %p145, %p146
      %p148 = scmp.ne.s32.totalorder %s140, %s143
      %p149 = scmp.eq.s32.totalorder %s20, 0
      %p150 = por %p148, %p149
      %p151 = scmp.ne.s32.totalorder %s140, %s143
      %p152 = scmp.eq.s32.totalorder %s25, 1
      %p153 = por %p151, %p152
      %p154 = scmp.ne.s32.totalorder %s143, %s144
      %p155 = scmp.eq.s32.totalorder %s25, 0
      %p156 = por %p154, %p155
      %p157 = scmp.ne.s32.totalorder %s143, %s144
      %p158 = scmp.eq.s32.totalorder %s26, 1
      %p159 = por %p157, %p158
      %p161 = scmp.ne.s32.totalorder %s144, %s160
      %p162 = scmp.eq.s32.totalorder %s26, 0
      %p163 = por %p161, %p162
      %s164 = ssub.s32 %s20, %s27
      %p165 = scmp.eq.s32.totalorder %s164, 0
      %s167 = sadd.s32 %s166, 1
      %s168 = scalar_select %p165, %s166, %s167
      %p171 = pneg %p165
      %p172 = scmp.eq.s32.totalorder %s20, 1
      %p173 = por %p171, %p172
      %p174 = scmp.ne.s32.totalorder %s166, %s169
      %p175 = scmp.eq.s32.totalorder %s20, 0
      %p176 = por %p174, %p175
      %p177 = scmp.ne.s32.totalorder %s166, %s169
      %p178 = scmp.eq.s32.totalorder %s25, 1
      %p179 = por %p177, %p178
      %p180 = scmp.ne.s32.totalorder %s169, %s170
      %p181 = scmp.eq.s32.totalorder %s25, 0
      %p182 = por %p180, %p181
      %p183 = scmp.ne.s32.totalorder %s169, %s170
      %p184 = scmp.eq.s32.totalorder %s26, 1
      %p185 = por %p183, %p184
      %p187 = scmp.ne.s32.totalorder %s170, %s186
      %p188 = scmp.eq.s32.totalorder %s26, 0
      %p189 = por %p187, %p188
      %s190 = ssub.s32 %s20, %s27
      %p191 = scmp.eq.s32.totalorder %s190, 0
      %s193 = sadd.s32 %s192, 1
      %s194 = scalar_select %p191, %s192, %s193
      %p197 = pneg %p191
      %p198 = scmp.eq.s32.totalorder %s20, 1
      %p199 = por %p197, %p198
      %p200 = scmp.ne.s32.totalorder %s192, %s195
      %p201 = scmp.eq.s32.totalorder %s20, 0
      %p202 = por %p200, %p201
      %p203 = scmp.ne.s32.totalorder %s192, %s195
      %p204 = scmp.eq.s32.totalorder %s25, 1
      %p205 = por %p203, %p204
      %p206 = scmp.ne.s32.totalorder %s195, %s196
      %p207 = scmp.eq.s32.totalorder %s25, 0
      %p208 = por %p206, %p207
      %p209 = scmp.ne.s32.totalorder %s195, %s196
      %p210 = scmp.eq.s32.totalorder %s26, 1
      %p211 = por %p209, %p210
      %p213 = scmp.ne.s32.totalorder %s196, %s212
      %p214 = scmp.eq.s32.totalorder %s26, 0
      %p215 = por %p213, %p214
      %s216 = ssub.s32 %s20, %s27
      %p217 = scmp.eq.s32.totalorder %s216, 0
      %s219 = sadd.s32 %s218, 1
      %s220 = scalar_select %p217, %s218, %s219
      %p223 = pneg %p217
      %p224 = scmp.eq.s32.totalorder %s20, 1
      %p225 = por %p223, %p224
      %p226 = scmp.ne.s32.totalorder %s218, %s221
      %p227 = scmp.eq.s32.totalorder %s20, 0
      %p228 = por %p226, %p227
      %p229 = scmp.ne.s32.totalorder %s218, %s221
      %p230 = scmp.eq.s32.totalorder %s25, 1
      %p231 = por %p229, %p230
      %p232 = scmp.ne.s32.totalorder %s221, %s222
      %p233 = scmp.eq.s32.totalorder %s25, 0
      %p234 = por %p232, %p233
      %p235 = scmp.ne.s32.totalorder %s221, %s222
      %p236 = scmp.eq.s32.totalorder %s26, 1
      %p237 = por %p235, %p236
      %p239 = scmp.ne.s32.totalorder %s222, %s238
      %p240 = scmp.eq.s32.totalorder %s26, 0
      %p241 = por %p239, %p240
      %s243 = sadd.s32 %s242, 1
      %p246 = scmp.eq.s32.totalorder %s20, 1
      %p247 = scmp.ne.s32.totalorder %s242, %s244
      %p248 = scmp.eq.s32.totalorder %s20, 0
      %p249 = por %p247, %p248
      %p250 = scmp.ne.s32.totalorder %s242, %s244
      %p251 = scmp.eq.s32.totalorder %s25, 1
      %p252 = por %p250, %p251
      %p253 = scmp.ne.s32.totalorder %s244, %s245
      %p254 = scmp.eq.s32.totalorder %s25, 0
      %p255 = por %p253, %p254
      %p256 = scmp.ne.s32.totalorder %s244, %s245
      %p257 = scmp.eq.s32.totalorder %s26, 1
      %p258 = por %p256, %p257
      %p260 = scmp.ne.s32.totalorder %s245, %s259
      %p261 = scmp.eq.s32.totalorder %s26, 0
      %p262 = por %p260, %p261
      %s264 = sadd.s32 %s263, 1
      %p267 = scmp.eq.s32.totalorder %s20, 1
      %p268 = scmp.ne.s32.totalorder %s263, %s265
      %p269 = scmp.eq.s32.totalorder %s20, 0
      %p270 = por %p268, %p269
      %p271 = scmp.ne.s32.totalorder %s263, %s265
      %p272 = scmp.eq.s32.totalorder %s25, 1
      %p273 = por %p271, %p272
      %p274 = scmp.ne.s32.totalorder %s265, %s266
      %p275 = scmp.eq.s32.totalorder %s25, 0
      %p276 = por %p274, %p275
      %p277 = scmp.ne.s32.totalorder %s265, %s266
      %p278 = scmp.eq.s32.totalorder %s26, 1
      %p279 = por %p277, %p278
      %p281 = scmp.ne.s32.totalorder %s266, %s280
      %p282 = scmp.eq.s32.totalorder %s26, 0
      %p283 = por %p281, %p282
      %s285 = sadd.s32 %s284, 1
      %p288 = scmp.eq.s32.totalorder %s20, 1
      %p289 = scmp.ne.s32.totalorder %s284, %s286
      %p290 = scmp.eq.s32.totalorder %s20, 0
      %p291 = por %p289, %p290
      %p292 = scmp.ne.s32.totalorder %s284, %s286
      %p293 = scmp.eq.s32.totalorder %s25, 1
      %p294 = por %p292, %p293
      %p295 = scmp.ne.s32.totalorder %s286, %s287
      %p296 = scmp.eq.s32.totalorder %s25, 0
      %p297 = por %p295, %p296
      %p298 = scmp.ne.s32.totalorder %s286, %s287
      %p299 = scmp.eq.s32.totalorder %s26, 1
      %p300 = por %p298, %p299
      %p302 = scmp.ne.s32.totalorder %s287, %s301
      %p303 = scmp.eq.s32.totalorder %s26, 0
      %p304 = por %p302, %p303
      %s306 = sadd.s32 %s305, 1
      %p309 = scmp.eq.s32.totalorder %s20, 1
      %p310 = scmp.ne.s32.totalorder %s305, %s307
      %p311 = scmp.eq.s32.totalorder %s20, 0
      %p312 = por %p310, %p311
      %p313 = scmp.ne.s32.totalorder %s305, %s307
      %p314 = scmp.eq.s32.totalorder %s25, 1
      %p315 = por %p313, %p314
      %p316 = scmp.ne.s32.totalorder %s307, %s308
      %p317 = scmp.eq.s32.totalorder %s25, 0
      %p318 = por %p316, %p317
      %p319 = scmp.ne.s32.totalorder %s307, %s308
      %p320 = scmp.eq.s32.totalorder %s26, 1
      %p321 = por %p319, %p320
      %p323 = scmp.ne.s32.totalorder %s308, %s322
      %p324 = scmp.eq.s32.totalorder %s26, 0
      %p325 = por %p323, %p324
      %s327 = sadd.s32 %s326, 1
      %p330 = scmp.eq.s32.totalorder %s20, 1
      %p331 = scmp.ne.s32.totalorder %s326, %s328
      %p332 = scmp.eq.s32.totalorder %s20, 0
      %p333 = por %p331, %p332
      %p334 = scmp.ne.s32.totalorder %s326, %s328
      %p335 = scmp.eq.s32.totalorder %s25, 1
      %p336 = por %p334, %p335
      %p337 = scmp.ne.s32.totalorder %s328, %s329
      %p338 = scmp.eq.s32.totalorder %s25, 0
      %p339 = por %p337, %p338
      %p340 = scmp.ne.s32.totalorder %s328, %s329
      %p341 = scmp.eq.s32.totalorder %s26, 1
      %p342 = por %p340, %p341
      %p344 = scmp.ne.s32.totalorder %s329, %s343
      %p345 = scmp.eq.s32.totalorder %s26, 0
      %p346 = por %p344, %p345
      %p347 = scmp.le.s32.totalorder 1, %s20
      %p348 = scmp.lt.s32.totalorder %s20, 3
      %p349 = pnand %p347, %p348
      %p350 = pneg %p349
      // Predicated region
      $region9: #{bert_classifier_forward.1} parent=5 // pred_check
        _
      $region10: #{bert_classifier_forward.1} parent=5 // pred_check_branch
        %352 = sbr.rel (%p349) target = $region12
      $region11: #{bert_classifier_forward.1} parent=5 // pred_region
        %s353 = ssub.s32 %s20, 1
        // Predicated region
        $region13: #{bert_classifier_forward.1} parent=11 // pred_check
          %p354 = pneg %p41
        $region14: #{bert_classifier_forward.1} parent=11 // pred_check_branch
          %356 = sbr.rel (%p354) target = $region16
        $region15: #{bert_classifier_forward.1} parent=11 // pred_region
          _
        $region16: #{bert_classifier_forward.1} parent=11 // pred_fallthru
          _
        // Predicated region
        $region17: #{bert_classifier_forward.1} parent=11 // pred_check
          %p357 = pneg %p62
        $region18: #{bert_classifier_forward.1} parent=11 // pred_check_branch
          %359 = sbr.rel (%p357) target = $region20
        $region19: #{bert_classifier_forward.1} parent=11 // pred_region
          _
        $region20: #{bert_classifier_forward.1} parent=11 // pred_fallthru
          _
        // Predicated region
        $region21: #{bert_classifier_forward.1} parent=11 // pred_check
          %p360 = pneg %p83
        $region22: #{bert_classifier_forward.1} parent=11 // pred_check_branch
          %362 = sbr.rel (%p360) target = $region24
        $region23: #{bert_classifier_forward.1} parent=11 // pred_region
          _
        $region24: #{bert_classifier_forward.1} parent=11 // pred_fallthru
          _
        // Predicated region
        $region25: #{bert_classifier_forward.1} parent=11 // pred_check
          %p363 = pneg %p104
        $region26: #{bert_classifier_forward.1} parent=11 // pred_check_branch
          %365 = sbr.rel (%p363) target = $region28
        $region27: #{bert_classifier_forward.1} parent=11 // pred_region
          _
        $region28: #{bert_classifier_forward.1} parent=11 // pred_fallthru
          _
        // Predicated region
        $region29: #{bert_classifier_forward.1} parent=11 // pred_check
          %p366 = pneg %p255
        $region30: #{bert_classifier_forward.1} parent=11 // pred_check_branch
          %368 = sbr.rel (%p366) target = $region32
        $region31: #{bert_classifier_forward.1} parent=11 // pred_region
          _
        $region32: #{bert_classifier_forward.1} parent=11 // pred_fallthru
          _
        // Predicated region
        $region33: #{bert_classifier_forward.1} parent=11 // pred_check
          %p369 = pneg %p276
        $region34: #{bert_classifier_forward.1} parent=11 // pred_check_branch
          %371 = sbr.rel (%p369) target = $region36
        $region35: #{bert_classifier_forward.1} parent=11 // pred_region
          _
        $region36: #{bert_classifier_forward.1} parent=11 // pred_fallthru
          _
        // Predicated region
        $region37: #{bert_classifier_forward.1} parent=11 // pred_check
          %p372 = pneg %p297
        $region38: #{bert_classifier_forward.1} parent=11 // pred_check_branch
          %374 = sbr.rel (%p372) target = $region40
        $region39: #{bert_classifier_forward.1} parent=11 // pred_region
          _
        $region40: #{bert_classifier_forward.1} parent=11 // pred_fallthru
          _
        // Predicated region
        $region41: #{bert_classifier_forward.1} parent=11 // pred_check
          %p375 = pneg %p318
        $region42: #{bert_classifier_forward.1} parent=11 // pred_check_branch
          %377 = sbr.rel (%p375) target = $region44
        $region43: #{bert_classifier_forward.1} parent=11 // pred_region
          _
        $region44: #{bert_classifier_forward.1} parent=11 // pred_fallthru
          _
      $region12: #{bert_classifier_forward.1} parent=5 // pred_fallthru
        _
      %p378 = scmp.lt.s32.totalorder %s20, 2
      // Predicated region
      $region45: #{bert_classifier_forward.1} parent=5 // pred_check
        %p379 = pneg %p378
      $region46: #{bert_classifier_forward.1} parent=5 // pred_check_branch
        %381 = sbr.rel (%p379) target = $region48
      $region47: #{bert_classifier_forward.1} parent=5 // pred_region
        // Predicated region
        $region49: #{bert_classifier_forward.1} parent=47 // pred_check
          %p382 = pneg %p124
        $region50: #{bert_classifier_forward.1} parent=47 // pred_check_branch
          %384 = sbr.rel (%p382) target = $region52
        $region51: #{bert_classifier_forward.1} parent=47 // pred_region
          %p385 = scmp.lt.s32.totalorder %s20, 1
          %s386 = scalar_select %p385, %s20, 1
          %s387 = smul.addr %s386, 4
          %s388 = smul.addr %s387, 4
          %s389 = scalar_lea.vmem %s4, %s388
        $region52: #{bert_classifier_forward.1} parent=47 // pred_fallthru
          _
        // Predicated region
        $region53: #{bert_classifier_forward.1} parent=47 // pred_check
          %p390 = pneg %p150
        $region54: #{bert_classifier_forward.1} parent=47 // pred_check_branch
          %392 = sbr.rel (%p390) target = $region56
        $region55: #{bert_classifier_forward.1} parent=47 // pred_region
          %p393 = scmp.lt.s32.totalorder %s20, 1
          %s394 = scalar_select %p393, %s20, 1
          %s395 = smul.addr %s394, 4
          %s396 = smul.addr %s395, 4
          %s397 = scalar_lea.vmem %s5, %s396
        $region56: #{bert_classifier_forward.1} parent=47 // pred_fallthru
          _
        // Predicated region
        $region57: #{bert_classifier_forward.1} parent=47 // pred_check
          %p398 = pneg %p176
        $region58: #{bert_classifier_forward.1} parent=47 // pred_check_branch
          %400 = sbr.rel (%p398) target = $region60
        $region59: #{bert_classifier_forward.1} parent=47 // pred_region
          %p401 = scmp.lt.s32.totalorder %s20, 1
          %s402 = scalar_select %p401, %s20, 1
          %s403 = smul.addr %s402, 4
          %s404 = smul.addr %s403, 4
          %s405 = scalar_lea.vmem %s6, %s404
        $region60: #{bert_classifier_forward.1} parent=47 // pred_fallthru
          _
        // Predicated region
        $region61: #{bert_classifier_forward.1} parent=47 // pred_check
          %p406 = pneg %p202
        $region62: #{bert_classifier_forward.1} parent=47 // pred_check_branch
          %408 = sbr.rel (%p406) target = $region64
        $region63: #{bert_classifier_forward.1} parent=47 // pred_region
          %p409 = scmp.lt.s32.totalorder %s20, 1
          %s410 = scalar_select %p409, %s20, 1
          %s411 = smul.addr %s410, 8
          %s412 = smul.addr %s411, 4
          %s413 = scalar_lea.vmem %s7, %s412
        $region64: #{bert_classifier_forward.1} parent=47 // pred_fallthru
          _
        // Predicated region
        $region65: #{bert_classifier_forward.1} parent=47 // pred_check
          %p414 = pneg %p228
        $region66: #{bert_classifier_forward.1} parent=47 // pred_check_branch
          %416 = sbr.rel (%p414) target = $region68
        $region67: #{bert_classifier_forward.1} parent=47 // pred_region
          %p417 = scmp.lt.s32.totalorder %s20, 1
          %s418 = scalar_select %p417, %s20, 1
          %s419 = smul.addr %s418, 8
          %s420 = scalar_lea.vmem %s8, %s419
        $region68: #{bert_classifier_forward.1} parent=47 // pred_fallthru
          _
      $region48: #{bert_classifier_forward.1} parent=5 // pred_fallthru
        _
      %p421 = scmp.le.s32.totalorder 1, %s20
      %p422 = scmp.lt.s32.totalorder %s20, 3
      %p423 = pnand %p421, %p422
      %p424 = pneg %p423
      // Predicated region
      $region69: #{bert_classifier_forward.1} parent=5 // pred_check
        _
      $region70: #{bert_classifier_forward.1} parent=5 // pred_check_branch
        %426 = sbr.rel (%p423) target = $region72
      $region71: #{bert_classifier_forward.1} parent=5 // pred_region
        %s427 = ssub.s32 %s20, 1
        %p428 = pneg %p41
        %p429 = pneg %p38
        %p430 = pneg %p62
        %p431 = pneg %p59
        %p432 = pneg %p83
        %p433 = pneg %p80
        %p434 = pneg %p104
        %p435 = pneg %p101
        %p436 = scmp.lt.s32.totalorder %s25, 1
        %s437 = scalar_select %p436, %s25, 1
        %s438 = smul.addr %s437, 4
        %s439 = smul.addr %s438, 4
        %s440 = scalar_lea.vmem %s4, %s439
        %p441 = pneg %p130
        %p442 = pneg %p127
        %p443 = scmp.lt.s32.totalorder %s25, 1
        %s444 = scalar_select %p443, %s25, 1
        %s445 = smul.addr %s444, 4
        %s446 = smul.addr %s445, 4
        %s447 = scalar_lea.vmem %s5, %s446
        %p448 = pneg %p156
        %p449 = pneg %p153
        %p450 = scmp.lt.s32.totalorder %s25, 1
        %s451 = scalar_select %p450, %s25, 1
        %s452 = smul.addr %s451, 4
        %s453 = smul.addr %s452, 4
        %s454 = scalar_lea.vmem %s6, %s453
        %p455 = pneg %p182
        %p456 = pneg %p179
        %p457 = scmp.lt.s32.totalorder %s25, 1
        %s458 = scalar_select %p457, %s25, 1
        %s459 = smul.addr %s458, 8
        %s460 = smul.addr %s459, 4
        %s461 = scalar_lea.vmem %s7, %s460
        %p462 = pneg %p208
        %p463 = pneg %p205
        %p464 = scmp.lt.s32.totalorder %s25, 1
        %s465 = scalar_select %p464, %s25, 1
        %s466 = smul.addr %s465, 8
        %s467 = scalar_lea.vmem %s8, %s466
        %p468 = pneg %p234
        %p469 = pneg %p231
        %p470 = pneg %p255
        %p471 = pneg %p252
        %p472 = pneg %p276
        %p473 = pneg %p273
        %p474 = pneg %p297
        %p475 = pneg %p294
        %p476 = pneg %p318
        %p477 = pneg %p315
        %p478 = pneg %p339
        %p479 = pneg %p336
        %p480 = scmp.lt.s32.totalorder %s25, 1
        %s481 = scalar_select %p480, %s25, 1
        %s482 = smul.addr %s481, 4
        %s483 = smul.addr %s482, 4
        %s484 = scalar_lea.vmem %s4, %s483
        %p485 = scmp.lt.s32.totalorder %s25, 1
        %s486 = scalar_select %p485, %s25, 1
        %s487 = smul.addr %s486, 4
        %s488 = smul.addr %s487, 4
        %s489 = scalar_lea.vmem %s5, %s488
        %p490 = scmp.lt.s32.totalorder %s25, 1
        %s491 = scalar_select %p490, %s25, 1
        %s492 = smul.addr %s491, 4
        %s493 = smul.addr %s492, 4
        %s494 = scalar_lea.vmem %s6, %s493
        %p495 = scmp.lt.s32.totalorder %s25, 1
        %s496 = scalar_select %p495, %s25, 1
        %s497 = smul.addr %s496, 8
        %s498 = smul.addr %s497, 4
        %s499 = scalar_lea.vmem %s7, %s498
        %p500 = scmp.lt.s32.totalorder %s25, 1
        %s501 = scalar_select %p500, %s25, 1
        %s502 = smul.addr %s501, 8
        %s503 = scalar_lea.vmem %s8, %s502
        %p505 = scmp.eq.s32.totalorder %s25, 0
        // Predicated region
        $region73: #{bert_classifier_forward.1} parent=71 // pred_check
          %p506 = pneg %p505
        $region74: #{bert_classifier_forward.1} parent=71 // pred_check_branch
          %508 = sbr.rel (%p506) target = $region76
        $region75: #{bert_classifier_forward.1} parent=71 // pred_region
          %v509 = vld [vmem:[%s0] sm:$0xff]
          %v510 = vld [vmem:[%s0 + $0x8] sm:$0xff]
          %v511 = vld [vmem:[%s2] sm:$0x1]
          %v512 = vld [vmem:[%s3] sm:$0x1]
          %vm513 = vcmask 261120
          %v514 = vsel %vm513, %v509, 0.0
          %515 = vadd.xlane.f32.xlu0 %v514
          %v516 = vpop.xlane.xlu0 %515
          %v517 = vsel %vm513, %v510, 0.0
          %518 = vadd.xlane.f32.xlu0 %v517
          %v519 = vpop.xlane.xlu0 %518
          %v520 = vrcp.pop 32.0
          %v521 = vmul.f32 %v516, %v520
          %v522 = vmul.f32 %v519, %v520
          %v523 = vsub.f32 %v509, %v521
          %v524 = vsub.f32 %v510, %v522
          %v525 = vmul.f32 %v523, %v523
          %v526 = vmul.f32 %v524, %v524
          %v527 = vsel %vm513, %v525, 0.0
          %528 = vadd.xlane.f32.xlu0 %v527
          %v529 = vpop.xlane.xlu0 %528
          %v530 = vsel %vm513, %v526, 0.0
          %531 = vadd.xlane.f32.xlu0 %v530
          %v532 = vpop.xlane.xlu0 %531
          %v533 = vmul.f32 %v529, %v520
          %v534 = vmul.f32 %v532, %v520
          %v535 = vadd.f32 %v533, 1e-12
          %v536 = vadd.f32 %v534, 1e-12
          %v537 = vrsqrt.pop %v535
          %v538 = vrsqrt.pop %v536
          %v539 = vmul.f32 %v523, %v537
          %v540 = vmul.f32 %v524, %v538
          %v542 = vlaneseq
          %v543 = vshrl.u32 %v542, 7
          %v544 = vsub.s32 0, %v543
          %v545 = vrot.slane %v511, %v544
          %v547 = vmul.f32 %v539, %v545
          %v548 = vmul.f32 %v540, %v545
          %v550 = vlaneseq
          %v551 = vshrl.u32 %v550, 7
          %v552 = vsub.s32 0, %v551
          %v553 = vrot.slane %v512, %v552
          %v555 = vadd.f32 %v547, %v553
          %v556 = vadd.f32 %v548, %v553
          %557 = vst.msk [vmem:[#allocation2] sm:$0xff] %vm513, %v555
          %558 = vst.msk [vmem:[#allocation2 + $0x8] sm:$0xff] %vm513, %v556
        $region76: #{bert_classifier_forward.1} parent=71 // pred_fallthru
          _
        %v559 = vld [vmem:[#allocation2] sm:$0xff]
        %v560 = vld [vmem:[#allocation2 + $0x8] sm:$0xff]
        %v561 = vld [vmem:[%s503] sm:$0xff]
        %v562 = vpack.c.bf16 %v560, %v559
        %v563 = vld [vmem:[%s484] sm:$0xf]
        %v564 = vld [vmem:[%s484 + $0x4] sm:$0xf]
        %v565 = vld [vmem:[%s484 + $0x8] sm:$0xf]
        %v566 = vld [vmem:[%s484 + $0xc] sm:$0xf]
        %v567 = vlaneseq
        %v568 = vshrl.u32 %v567, 7
        %v569 = vsub.s32 0, %v568
        %v570 = vrot.slane %v561, %v569
        %v575 = vunpack.c.l.b16 %v563
        %v576 = vunpack.c.l.b16 %v564
        %v577 = vunpack.c.l.b16 %v565
        %v578 = vunpack.c.l.b16 %v566
        %v579 = vpack.c.b16 %v576, %v575
        %v580 = vpack.c.b16 %v578, %v577
        %vm583 = vcmask 261120
        %v585 = vsel %vm583, %v562, 0
        %587 = vmatprep.subr.bf16.mxu0 0
        %588 = vmatpush1.bf16.msra.mxu0 %v579
        %589 = vmatprep.subr.bf16.mxu0 0
        %590 = vmatpush1.bf16.msra.mxu0 %v580
        %591 = vmatprep.subr.bf16.mxu0 0
        %592 = vmatpush1.bf16.msra.mxu0 0
        %593 = vmatprep.subr.bf16.mxu0 0
        %594 = vmatpush1.bf16.msra.mxu0 0
        %595 = vmatprep.subr.bf16.mxu0 0
        %596 = vmatpush1.bf16.msra.mxu0 0
        %597 = vmatprep.subr.bf16.mxu0 0
        %598 = vmatpush1.bf16.msra.mxu0 0
        %599 = vmatprep.subr.bf16.mxu0 0
        %600 = vmatpush1.bf16.msra.mxu0 0
        %601 = vmatprep.subr.bf16.mxu0 0
        %602 = vmatpush1.bf16.msra.mxu0 0
        %603 = vmatprep.subr.bf16.mxu0 0
        %604 = vmatpush1.bf16.msra.mxu0 0
        %605 = vmatprep.subr.bf16.mxu0 0
        %606 = vmatpush1.bf16.msra.mxu0 0
        %607 = vmatprep.subr.bf16.mxu0 0
        %608 = vmatpush1.bf16.msra.mxu0 0
        %609 = vmatprep.subr.bf16.mxu0 0
        %610 = vmatpush1.bf16.msra.mxu0 0
        %611 = vmatprep.subr.bf16.mxu0 0
        %612 = vmatpush1.bf16.msra.mxu0 0
        %613 = vmatprep.subr.bf16.mxu0 0
        %614 = vmatpush1.bf16.msra.mxu0 0
        %615 = vmatprep.subr.bf16.mxu0 0
        %616 = vmatpush1.bf16.msra.mxu0 0
        %617 = vmatprep.subr.bf16.mxu0 0
        %618 = vmatpush1.bf16.msra.mxu0 0
        %619 = vmatprep.mubr.bf16.mxu0 0
        %620 = vmatmul.mubr.bf16.gmra.mrb[0].mxu0 %v585
        %v621 = vpop.f32.mrb[0].mxu0
        %v622 = vadd.f32 %v570, %v621
        %v623 = vpop.f32.mrb[0].mxu0
        %v624 = vpop.f32.mrb[0].mxu0
        %v625 = vadd.f32 %v570, %v624
        %v626 = vpop.f32.mrb[0].mxu0
        %627 = vdwg.mxu0
        %v628 = vld [vmem:[%s1] sm:$0x1]
        %v629 = vld [vmem:[%s1 + $0x1] sm:$0x1]
        %v630 = vpack.c.bf16 %v622, %v622
        %v631 = vpack.c.bf16 %v625, %v625
        %v634 = vlaneseq
        %v635 = vshrl.u32 %v634, 7
        %v636 = vsub.s32 0, %v635
        %v637 = vrot.slane %v628, %v636
        %v638 = vlaneseq
        %v639 = vshrl.u32 %v638, 7
        %v640 = vsub.s32 0, %v639
        %v641 = vrot.slane %v629, %v640
        %645 = vrot.lane.b32.xlu0 %v630, 96
        %v646 = vpop.permute.xlu0 %645
        %vm647 = vcmask 64512
        %v649 = vsel %vm647, %v630, 0
        %v652 = vsel %vm647, %v646, 0
        %654 = vmatprep.subr.bf16.mxu0 0
        %655 = vmatpush1.bf16.xpose.msra.mxu0 %v652
        %656 = vmatprep.subr.bf16.mxu0 0
        %657 = vmatpush1.bf16.xpose.msra.mxu0 0
        %658 = vmatprep.subr.bf16.mxu0 0
        %659 = vmatpush1.bf16.xpose.msra.mxu0 0
        %660 = vmatprep.subr.bf16.mxu0 0
        %661 = vmatpush1.bf16.xpose.msra.mxu0 0
        %662 = vmatprep.subr.bf16.mxu0 0
        %663 = vmatpush1.bf16.xpose.msra.mxu0 0
        %664 = vmatprep.subr.bf16.mxu0 0
        %665 = vmatpush1.bf16.xpose.msra.mxu0 0
        %666 = vmatprep.subr.bf16.mxu0 0
        %667 = vmatpush1.bf16.xpose.msra.mxu0 0
        %668 = vmatprep.subr.bf16.mxu0 0
        %669 = vmatpush1.bf16.xpose.msra.mxu0 0
        %670 = vmatprep.subr.bf16.mxu0 0
        %671 = vmatpush1.bf16.xpose.msra.mxu0 0
        %672 = vmatprep.subr.bf16.mxu0 0
        %673 = vmatpush1.bf16.xpose.msra.mxu0 0
        %674 = vmatprep.subr.bf16.mxu0 0
        %675 = vmatpush1.bf16.xpose.msra.mxu0 0
        %676 = vmatprep.subr.bf16.mxu0 0
        %677 = vmatpush1.bf16.xpose.msra.mxu0 0
        %678 = vmatprep.subr.bf16.mxu0 0
        %679 = vmatpush1.bf16.xpose.msra.mxu0 0
        %680 = vmatprep.subr.bf16.mxu0 0
        %681 = vmatpush1.bf16.xpose.msra.mxu0 0
        %682 = vmatprep.subr.bf16.mxu0 0
        %683 = vmatpush1.bf16.xpose.msra.mxu0 0
        %684 = vmatprep.subr.bf16.mxu0 0
        %685 = vmatpush1.bf16.xpose.msra.mxu0 0
        %686 = vmatprep.mubr.bf16.mxu0 0
        %687 = vmatmul.mubr.bf16.gmra.mrb[0].mxu0 %v649
        %v688 = vpop.f32.mrb[0].mxu0
        %v689 = vadd.f32 %v637, %v688
        %v690 = vpop.f32.mrb[0].mxu0
        %v691 = vpop.f32.mrb[0].mxu0
        %v692 = vpop.f32.mrb[0].mxu0
        %693 = vdwg.mxu0
        %695 = vrot.lane.b32.xlu0 %v631, 96
        %v696 = vpop.permute.xlu0 %695
        %v698 = vsel %vm647, %v631, 0
        %v701 = vsel %vm647, %v696, 0
        %703 = vmatprep.subr.bf16.mxu0 0
        %704 = vmatpush1.bf16.xpose.msra.mxu0 %v701
        %705 = vmatprep.subr.bf16.mxu0 0
        %706 = vmatpush1.bf16.xpose.msra.mxu0 0
        %707 = vmatprep.subr.bf16.mxu0 0
        %708 = vmatpush1.bf16.xpose.msra.mxu0 0
        %709 = vmatprep.subr.bf16.mxu0 0
        %710 = vmatpush1.bf16.xpose.msra.mxu0 0
        %711 = vmatprep.subr.bf16.mxu0 0
        %712 = vmatpush1.bf16.xpose.msra.mxu0 0
        %713 = vmatprep.subr.bf16.mxu0 0
        %714 = vmatpush1.bf16.xpose.msra.mxu0 0
        %715 = vmatprep.subr.bf16.mxu0 0
        %716 = vmatpush1.bf16.xpose.msra.mxu0 0
        %717 = vmatprep.subr.bf16.mxu0 0
        %718 = vmatpush1.bf16.xpose.msra.mxu0 0
        %719 = vmatprep.subr.bf16.mxu0 0
        %720 = vmatpush1.bf16.xpose.msra.mxu0 0
        %721 = vmatprep.subr.bf16.mxu0 0
        %722 = vmatpush1.bf16.xpose.msra.mxu0 0
        %723 = vmatprep.subr.bf16.mxu0 0
        %724 = vmatpush1.bf16.xpose.msra.mxu0 0
        %725 = vmatprep.subr.bf16.mxu0 0
        %726 = vmatpush1.bf16.xpose.msra.mxu0 0
        %727 = vmatprep.subr.bf16.mxu0 0
        %728 = vmatpush1.bf16.xpose.msra.mxu0 0
        %729 = vmatprep.subr.bf16.mxu0 0
        %730 = vmatpush1.bf16.xpose.msra.mxu0 0
        %731 = vmatprep.subr.bf16.mxu0 0
        %732 = vmatpush1.bf16.xpose.msra.mxu0 0
        %733 = vmatprep.subr.bf16.mxu0 0
        %734 = vmatpush1.bf16.xpose.msra.mxu0 0
        %735 = vmatprep.mubr.bf16.mxu0 0
        %736 = vmatmul.mubr.bf16.gmra.mrb[0].mxu0 %v698
        %v737 = vpop.f32.mrb[0].mxu0
        %v738 = vadd.f32 %v641, %v737
        %v739 = vpop.f32.mrb[0].mxu0
        %v740 = vpop.f32.mrb[0].mxu0
        %v741 = vpop.f32.mrb[0].mxu0
        %742 = vdwg.mxu0
        %v743 = vsel %vm647, %v689, -inf
        %744 = vmax.xlane.f32.xlu0 %v743
        %v745 = vpop.xlane.xlu0 %744
        %v746 = vsel %vm647, %v738, -inf
        %747 = vmax.xlane.f32.xlu0 %v746
        %v748 = vpop.xlane.xlu0 %747
        %v749 = vsub.f32 %v689, %v745
        %v750 = vsub.f32 %v738, %v748
        %v751 = vmul.f32 %v749, 1.442695
        %v752 = vpow.pop %v751
        %v753 = vmul.f32 %v750, 1.442695
        %v754 = vpow.pop %v753
        %v755 = vsel %vm647, %v752, 0.0
        %756 = vadd.xlane.f32.xlu0 %v755
        %v757 = vpop.xlane.xlu0 %756
        %v758 = vsel %vm647, %v754, 0.0
        %759 = vadd.xlane.f32.xlu0 %v758
        %v760 = vpop.xlane.xlu0 %759
        %v761 = vrcp.pop %v757
        %v762 = vrcp.pop %v760
        %v763 = vmul.f32 %v752, %v761
        %v764 = vmul.f32 %v754, %v762
        %v765 = vpack.c.bf16 %v763, %v763
        %v766 = vpack.c.bf16 %v764, %v764
        %767 = vrot.lane.b32.xlu0 %v630, 64
        %v768 = vpop.permute.xlu0 %767
        %v770 = vsel %vm647, %v765, 0
        %vm772 = vcmask 1043456
        %v774 = vsel %vm772, %v768, 0
        %776 = vmatprep.subr.bf16.mxu0 0
        %777 = vmatpush1.bf16.msra.mxu0 %v774
        %778 = vmatprep.subr.bf16.mxu0 0
        %779 = vmatpush1.bf16.msra.mxu0 0
        %780 = vmatprep.subr.bf16.mxu0 0
        %781 = vmatpush1.bf16.msra.mxu0 0
        %782 = vmatprep.subr.bf16.mxu0 0
        %783 = vmatpush1.bf16.msra.mxu0 0
        %784 = vmatprep.subr.bf16.mxu0 0
        %785 = vmatpush1.bf16.msra.mxu0 0
        %786 = vmatprep.subr.bf16.mxu0 0
        %787 = vmatpush1.bf16.msra.mxu0 0
        %788 = vmatprep.subr.bf16.mxu0 0
        %789 = vmatpush1.bf16.msra.mxu0 0
        %790 = vmatprep.subr.bf16.mxu0 0
        %791 = vmatpush1.bf16.msra.mxu0 0
        %792 = vmatprep.subr.bf16.mxu0 0
        %793 = vmatpush1.bf16.msra.mxu0 0
        %794 = vmatprep.subr.bf16.mxu0 0
        %795 = vmatpush1.bf16.msra.mxu0 0
        %796 = vmatprep.subr.bf16.mxu0 0
        %797 = vmatpush1.bf16.msra.mxu0 0
        %798 = vmatprep.subr.bf16.mxu0 0
        %799 = vmatpush1.bf16.msra.mxu0 0
        %800 = vmatprep.subr.bf16.mxu0 0
        %801 = vmatpush1.bf16.msra.mxu0 0
        %802 = vmatprep.subr.bf16.mxu0 0
        %803 = vmatpush1.bf16.msra.mxu0 0
        %804 = vmatprep.subr.bf16.mxu0 0
        %805 = vmatpush1.bf16.msra.mxu0 0
        %806 = vmatprep.subr.bf16.mxu0 0
        %807 = vmatpush1.bf16.msra.mxu0 0
        %808 = vmatprep.mubr.bf16.mxu0 0
        %809 = vmatmul.mubr.bf16.gmra.mrb[0].mxu0 %v770
        %v810 = vpop.f32.mrb[0].mxu0
        %v811 = vadd.f32 0.0, %v810
        %v812 = vpop.f32.mrb[0].mxu0
        %v813 = vpop.f32.mrb[0].mxu0
        %v814 = vpop.f32.mrb[0].mxu0
        %815 = vdwg.mxu0
        %816 = vrot.lane.b32.xlu0 %v631, 64
        %v817 = vpop.permute.xlu0 %816
        %v819 = vsel %vm647, %v766, 0
        %v822 = vsel %vm772, %v817, 0
        %824 = vmatprep.subr.bf16.mxu0 0
        %825 = vmatpush1.bf16.msra.mxu0 %v822
        %826 = vmatprep.subr.bf16.mxu0 0
        %827 = vmatpush1.bf16.msra.mxu0 0
        %828 = vmatprep.subr.bf16.mxu0 0
        %829 = vmatpush1.bf16.msra.mxu0 0
        %830 = vmatprep.subr.bf16.mxu0 0
        %831 = vmatpush1.bf16.msra.mxu0 0
        %832 = vmatprep.subr.bf16.mxu0 0
        %833 = vmatpush1.bf16.msra.mxu0 0
        %834 = vmatprep.subr.bf16.mxu0 0
        %835 = vmatpush1.bf16.msra.mxu0 0
        %836 = vmatprep.subr.bf16.mxu0 0
        %837 = vmatpush1.bf16.msra.mxu0 0
        %838 = vmatprep.subr.bf16.mxu0 0
        %839 = vmatpush1.bf16.msra.mxu0 0
        %840 = vmatprep.subr.bf16.mxu0 0
        %841 = vmatpush1.bf16.msra.mxu0 0
        %842 = vmatprep.subr.bf16.mxu0 0
        %843 = vmatpush1.bf16.msra.mxu0 0
        %844 = vmatprep.subr.bf16.mxu0 0
        %845 = vmatpush1.bf16.msra.mxu0 0
        %846 = vmatprep.subr.bf16.mxu0 0
        %847 = vmatpush1.bf16.msra.mxu0 0
        %848 = vmatprep.subr.bf16.mxu0 0
        %849 = vmatpush1.bf16.msra.mxu0 0
        %850 = vmatprep.subr.bf16.mxu0 0
        %851 = vmatpush1.bf16.msra.mxu0 0
        %852 = vmatprep.subr.bf16.mxu0 0
        %853 = vmatpush1.bf16.msra.mxu0 0
        %854 = vmatprep.subr.bf16.mxu0 0
        %855 = vmatpush1.bf16.msra.mxu0 0
        %856 = vmatprep.mubr.bf16.mxu0 0
        %857 = vmatmul.mubr.bf16.gmra.mrb[0].mxu0 %v819
        %v858 = vpop.f32.mrb[0].mxu0
        %v859 = vadd.f32 0.0, %v858
        %v860 = vpop.f32.mrb[0].mxu0
        %v861 = vpop.f32.mrb[0].mxu0
        %v862 = vpop.f32.mrb[0].mxu0
        %863 = vdwg.mxu0
        %864 = vrot.lane.b32.xlu0 %v630, 120
        %v865 = vpop.permute.xlu0 %864
        %866 = vrot.lane.b32.xlu0 %v630, 88
        %v867 = vpop.permute.xlu0 %866
        %v869 = vsel %vm647, %v865, 0
        %v872 = vsel %vm647, %v867, 0
        %874 = vmatprep.subr.bf16.mxu0 0
        %875 = vmatpush1.bf16.xpose.msra.mxu0 %v872
        %876 = vmatprep.subr.bf16.mxu0 0
        %877 = vmatpush1.bf16.xpose.msra.mxu0 0
        %878 = vmatprep.subr.bf16.mxu0 0
        %879 = vmatpush1.bf16.xpose.msra.mxu0 0
        %880 = vmatprep.subr.bf16.mxu0 0
        %881 = vmatpush1.bf16.xpose.msra.mxu0 0
        %882 = vmatprep.subr.bf16.mxu0 0
        %883 = vmatpush1.bf16.xpose.msra.mxu0 0
        %884 = vmatprep.subr.bf16.mxu0 0
        %885 = vmatpush1.bf16.xpose.msra.mxu0 0
        %886 = vmatprep.subr.bf16.mxu0 0
        %887 = vmatpush1.bf16.xpose.msra.mxu0 0
        %888 = vmatprep.subr.bf16.mxu0 0
        %889 = vmatpush1.bf16.xpose.msra.mxu0 0
        %890 = vmatprep.subr.bf16.mxu0 0
        %891 = vmatpush1.bf16.xpose.msra.mxu0 0
        %892 = vmatprep.subr.bf16.mxu0 0
        %893 = vmatpush1.bf16.xpose.msra.mxu0 0
        %894 = vmatprep.subr.bf16.mxu0 0
        %895 = vmatpush1.bf16.xpose.msra.mxu0 0
        %896 = vmatprep.subr.bf16.mxu0 0
        %897 = vmatpush1.bf16.xpose.msra.mxu0 0
        %898 = vmatprep.subr.bf16.mxu0 0
        %899 = vmatpush1.bf16.xpose.msra.mxu0 0
        %900 = vmatprep.subr.bf16.mxu0 0
        %901 = vmatpush1.bf16.xpose.msra.mxu0 0
        %902 = vmatprep.subr.bf16.mxu0 0
        %903 = vmatpush1.bf16.xpose.msra.mxu0 0
        %904 = vmatprep.subr.bf16.mxu0 0
        %905 = vmatpush1.bf16.xpose.msra.mxu0 0
        %906 = vmatprep.mubr.bf16.mxu0 0
        %907 = vmatmul.mubr.bf16.gmra.mrb[0].mxu0 %v869
        %v908 = vpop.f32.mrb[0].mxu0
        %v909 = vadd.f32 %v637, %v908
        %v910 = vpop.f32.mrb[0].mxu0
        %v911 = vpop.f32.mrb[0].mxu0
        %v912 = vpop.f32.mrb[0].mxu0
        %913 = vdwg.mxu0
        %914 = vrot.lane.b32.xlu0 %v631, 120
        %v915 = vpop.permute.xlu0 %914
        %916 = vrot.lane.b32.xlu0 %v631, 88
        %v917 = vpop.permute.xlu0 %916
        %v919 = vsel %vm647, %v915, 0
        %v922 = vsel %vm647, %v917, 0
        %924 = vmatprep.subr.bf16.mxu0 0
        %925 = vmatpush1.bf16.xpose.msra.mxu0 %v922
        %926 = vmatprep.subr.bf16.mxu0 0
        %927 = vmatpush1.bf16.xpose.msra.mxu0 0
        %928 = vmatprep.subr.bf16.mxu0 0
        %929 = vmatpush1.bf16.xpose.msra.mxu0 0
        %930 = vmatprep.subr.bf16.mxu0 0
        %931 = vmatpush1.bf16.xpose.msra.mxu0 0
        %932 = vmatprep.subr.bf16.mxu0 0
        %933 = vmatpush1.bf16.xpose.msra.mxu0 0
        %934 = vmatprep.subr.bf16.mxu0 0
        %935 = vmatpush1.bf16.xpose.msra.mxu0 0
        %936 = vmatprep.subr.bf16.mxu0 0
        %937 = vmatpush1.bf16.xpose.msra.mxu0 0
        %938 = vmatprep.subr.bf16.mxu0 0
        %939 = vmatpush1.bf16.xpose.msra.mxu0 0
        %940 = vmatprep.subr.bf16.mxu0 0
        %941 = vmatpush1.bf16.xpose.msra.mxu0 0
        %942 = vmatprep.subr.bf16.mxu0 0
        %943 = vmatpush1.bf16.xpose.msra.mxu0 0
        %944 = vmatprep.subr.bf16.mxu0 0
        %945 = vmatpush1.bf16.xpose.msra.mxu0 0
        %946 = vmatprep.subr.bf16.mxu0 0
        %947 = vmatpush1.bf16.xpose.msra.mxu0 0
        %948 = vmatprep.subr.bf16.mxu0 0
        %949 = vmatpush1.bf16.xpose.msra.mxu0 0
        %950 = vmatprep.subr.bf16.mxu0 0
        %951 = vmatpush1.bf16.xpose.msra.mxu0 0
        %952 = vmatprep.subr.bf16.mxu0 0
        %953 = vmatpush1.bf16.xpose.msra.mxu0 0
        %954 = vmatprep.subr.bf16.mxu0 0
        %955 = vmatpush1.bf16.xpose.msra.mxu0 0
        %956 = vmatprep.mubr.bf16.mxu0 0
        %957 = vmatmul.mubr.bf16.gmra.mrb[0].mxu0 %v919
        %v958 = vpop.f32.mrb[0].mxu0
        %v959 = vadd.f32 %v641, %v958
        %v960 = vpop.f32.mrb[0].mxu0
        %v961 = vpop.f32.mrb[0].mxu0
        %v962 = vpop.f32.mrb[0].mxu0
        %963 = vdwg.mxu0
        %v964 = vsel %vm647, %v909, -inf
        %965 = vmax.xlane.f32.xlu0 %v964
        %v966 = vpop.xlane.xlu0 %965
        %v967 = vsel %vm647, %v959, -inf
        %968 = vmax.xlane.f32.xlu0 %v967
        %v969 = vpop.xlane.xlu0 %968
        %v970 = vsub.f32 %v909, %v966
        %v971 = vsub.f32 %v959, %v969
        %v972 = vmul.f32 %v970, 1.442695
        %v973 = vpow.pop %v972
        %v974 = vmul.f32 %v971, 1.442695
        %v975 = vpow.pop %v974
        %v976 = vsel %vm647, %v973, 0.0
        %977 = vadd.xlane.f32.xlu0 %v976
        %v978 = vpop.xlane.xlu0 %977
        %v979 = vsel %vm647, %v975, 0.0
        %980 = vadd.xlane.f32.xlu0 %v979
        %v981 = vpop.xlane.xlu0 %980
        %v982 = vrcp.pop %v978
        %v983 = vrcp.pop %v981
        %v984 = vmul.f32 %v973, %v982
        %v985 = vmul.f32 %v975, %v983
        %v986 = vpack.c.bf16 %v984, %v984
        %v987 = vpack.c.bf16 %v985, %v985
        %988 = vrot.lane.b32.xlu0 %v630, 56
        %v989 = vpop.permute.xlu0 %988
        %v991 = vsel %vm647, %v986, 0
        %v994 = vsel %vm772, %v989, 0
        %996 = vmatprep.subr.bf16.mxu0 0
        %997 = vmatpush1.bf16.msra.mxu0 %v994
        %998 = vmatprep.subr.bf16.mxu0 0
        %999 = vmatpush1.bf16.msra.mxu0 0
        %1000 = vmatprep.subr.bf16.mxu0 0
        %1001 = vmatpush1.bf16.msra.mxu0 0
        %1002 = vmatprep.subr.bf16.mxu0 0
        %1003 = vmatpush1.bf16.msra.mxu0 0
        %1004 = vmatprep.subr.bf16.mxu0 0
        %1005 = vmatpush1.bf16.msra.mxu0 0
        %1006 = vmatprep.subr.bf16.mxu0 0
        %1007 = vmatpush1.bf16.msra.mxu0 0
        %1008 = vmatprep.subr.bf16.mxu0 0
        %1009 = vmatpush1.bf16.msra.mxu0 0
        %1010 = vmatprep.subr.bf16.mxu0 0
        %1011 = vmatpush1.bf16.msra.mxu0 0
        %1012 = vmatprep.subr.bf16.mxu0 0
        %1013 = vmatpush1.bf16.msra.mxu0 0
        %1014 = vmatprep.subr.bf16.mxu0 0
        %1015 = vmatpush1.bf16.msra.mxu0 0
        %1016 = vmatprep.subr.bf16.mxu0 0
        %1017 = vmatpush1.bf16.msra.mxu0 0
        %1018 = vmatprep.subr.bf16.mxu0 0
        %1019 = vmatpush1.bf16.msra.mxu0 0
        %1020 = vmatprep.subr.bf16.mxu0 0
        %1021 = vmatpush1.bf16.msra.mxu0 0
        %1022 = vmatprep.subr.bf16.mxu0 0
        %1023 = vmatpush1.bf16.msra.mxu0 0
        %1024 = vmatprep.subr.bf16.mxu0 0
        %1025 = vmatpush1.bf16.msra.mxu0 0
        %1026 = vmatprep.subr.bf16.mxu0 0
        %1027 = vmatpush1.bf16.msra.mxu0 0
        %1028 = vmatprep.mubr.bf16.mxu0 0
        %1029 = vmatmul.mubr.bf16.gmra.mrb[0].mxu0 %v991
        %v1030 = vpop.f32.mrb[0].mxu0
        %v1031 = vadd.f32 0.0, %v1030
        %v1032 = vpop.f32.mrb[0].mxu0
        %v1033 = vpop.f32.mrb[0].mxu0
        %v1034 = vpop.f32.mrb[0].mxu0
        %1035 = vdwg.mxu0
        %1036 = vrot.lane.b32.xlu0 %v631, 56
        %v1037 = vpop.permute.xlu0 %1036
        %v1039 = vsel %vm647, %v987, 0
        %v1042 = vsel %vm772, %v1037, 0
        %1044 = vmatprep.subr.bf16.mxu0 0
        %1045 = vmatpush1.bf16.msra.mxu0 %v1042
        %1046 = vmatprep.subr.bf16.mxu0 0
        %1047 = vmatpush1.bf16.msra.mxu0 0
        %1048 = vmatprep.subr.bf16.mxu0 0
        %1049 = vmatpush1.bf16.msra.mxu0 0
        %1050 = vmatprep.subr.bf16.mxu0 0
        %1051 = vmatpush1.bf16.msra.mxu0 0
        %1052 = vmatprep.subr.bf16.mxu0 0
        %1053 = vmatpush1.bf16.msra.mxu0 0
        %1054 = vmatprep.subr.bf16.mxu0 0
        %1055 = vmatpush1.bf16.msra.mxu0 0
        %1056 = vmatprep.subr.bf16.mxu0 0
        %1057 = vmatpush1.bf16.msra.mxu0 0
        %1058 = vmatprep.subr.bf16.mxu0 0
        %1059 = vmatpush1.bf16.msra.mxu0 0
        %1060 = vmatprep.subr.bf16.mxu0 0
        %1061 = vmatpush1.bf16.msra.mxu0 0
        %1062 = vmatprep.subr.bf16.mxu0 0
        %1063 = vmatpush1.bf16.msra.mxu0 0
        %1064 = vmatprep.subr.bf16.mxu0 0
        %1065 = vmatpush1.bf16.msra.mxu0 0
        %1066 = vmatprep.subr.bf16.mxu0 0
        %1067 = vmatpush1.bf16.msra.mxu0 0
        %1068 = vmatprep.subr.bf16.mxu0 0
        %1069 = vmatpush1.bf16.msra.mxu0 0
        %1070 = vmatprep.subr.bf16.mxu0 0
        %1071 = vmatpush1.bf16.msra.mxu0 0
        %1072 = vmatprep.subr.bf16.mxu0 0
        %1073 = vmatpush1.bf16.msra.mxu0 0
        %1074 = vmatprep.subr.bf16.mxu0 0
        %1075 = vmatpush1.bf16.msra.mxu0 0
        %1076 = vmatprep.mubr.bf16.mxu0 0
        %1077 = vmatmul.mubr.bf16.gmra.mrb[0].mxu0 %v1039
        %v1078 = vpop.f32.mrb[0].mxu0
        %v1079 = vadd.f32 0.0, %v1078
        %v1080 = vpop.f32.mrb[0].mxu0
        %v1081 = vpop.f32.mrb[0].mxu0
        %v1082 = vpop.f32.mrb[0].mxu0
        %1083 = vdwg.mxu0
        %1084 = vrot.lane.b32.xlu0 %v630, 112
        %v1085 = vpop.permute.xlu0 %1084
        %1086 = vrot.lane.b32.xlu0 %v630, 80
        %v1087 = vpop.permute.xlu0 %1086
        %v1089 = vsel %vm647, %v1085, 0
        %v1092 = vsel %vm647, %v1087, 0
        %1094 = vmatprep.subr.bf16.mxu0 0
        %1095 = vmatpush1.bf16.xpose.msra.mxu0 %v1092
        %1096 = vmatprep.subr.bf16.mxu0 0
        %1097 = vmatpush1.bf16.xpose.msra.mxu0 0
        %1098 = vmatprep.subr.bf16.mxu0 0
        %1099 = vmatpush1.bf16.xpose.msra.mxu0 0
        %1100 = vmatprep.subr.bf16.mxu0 0
        %1101 = vmatpush1.bf16.xpose.msra.mxu0 0
        %1102 = vmatprep.subr.bf16.mxu0 0
        %1103 = vmatpush1.bf16.xpose.msra.mxu0 0
        %1104 = vmatprep.subr.bf16.mxu0 0
        %1105 = vmatpush1.bf16.xpose.msra.mxu0 0
        %1106 = vmatprep.subr.bf16.mxu0 0
        %1107 = vmatpush1.bf16.xpose.msra.mxu0 0
        %1108 = vmatprep.subr.bf16.mxu0 0
        %1109 = vmatpush1.bf16.xpose.msra.mxu0 0
        %1110 = vmatprep.subr.bf16.mxu0 0
        %1111 = vmatpush1.bf16.xpose.msra.mxu0 0
        %1112 = vmatprep.subr.bf16.mxu0 0
        %1113 = vmatpush1.bf16.xpose.msra.mxu0 0
        %1114 = vmatprep.subr.bf16.mxu0 0
        %1115 = vmatpush1.bf16.xpose.msra.mxu0 0
        %1116 = vmatprep.subr.bf16.mxu0 0
        %1117 = vmatpush1.bf16.xpose.msra.mxu0 0
        %1118 = vmatprep.subr.bf16.mxu0 0
        %1119 = vmatpush1.bf16.xpose.msra.mxu0 0
        %1120 = vmatprep.subr.bf16.mxu0 0
        %1121 = vmatpush1.bf16.xpose.msra.mxu0 0
        %1122 = vmatprep.subr.bf16.mxu0 0
        %1123 = vmatpush1.bf16.xpose.msra.mxu0 0
        %1124 = vmatprep.subr.bf16.mxu0 0
        %1125 = vmatpush1.bf16.xpose.msra.mxu0 0
        %1126 = vmatprep.mubr.bf16.mxu0 0
        %1127 = vmatmul.mubr.bf16.gmra.mrb[0].mxu0 %v1089
        %v1128 = vpop.f32.mrb[0].mxu0
        %v1129 = vadd.f32 %v637, %v1128
        %v1130 = vpop.f32.mrb[0].mxu0
        %v1131 = vpop.f32.mrb[0].mxu0
        %v1132 = vpop.f32.mrb[0].mxu0
        %1133 = vdwg.mxu0
        %1134 = vrot.lane.b32.xlu0 %v631, 112
        %v1135 = vpop.permute.xlu0 %1134
        %1136 = vrot.lane.b32.xlu0 %v631, 80
        %v1137 = vpop.permute.xlu0 %1136
        %v1139 = vsel %vm647, %v1135, 0
        %v1142 = vsel %vm647, %v1137, 0
        %1144 = vmatprep.subr.bf16.mxu0 0
        %1145 = vmatpush1.bf16.xpose.msra.mxu0 %v1142
        %1146 = vmatprep.subr.bf16.mxu0 0
        %1147 = vmatpush1.bf16.xpose.msra.mxu0 0
        %1148 = vmatprep.subr.bf16.mxu0 0
        %1149 = vmatpush1.bf16.xpose.msra.mxu0 0
        %1150 = vmatprep.subr.bf16.mxu0 0
        %1151 = vmatpush1.bf16.xpose.msra.mxu0 0
        %1152 = vmatprep.subr.bf16.mxu0 0
        %1153 = vmatpush1.bf16.xpose.msra.mxu0 0
        %1154 = vmatprep.subr.bf16.mxu0 0
        %1155 = vmatpush1.bf16.xpose.msra.mxu0 0
        %1156 = vmatprep.subr.bf16.mxu0 0
        %1157 = vmatpush1.bf16.xpose.msra.mxu0 0
        %1158 = vmatprep.subr.bf16.mxu0 0
        %1159 = vmatpush1.bf16.xpose.msra.mxu0 0
        %1160 = vmatprep.subr.bf16.mxu0 0
        %1161 = vmatpush1.bf16.xpose.msra.mxu0 0
        %1162 = vmatprep.subr.bf16.mxu0 0
        %1163 = vmatpush1.bf16.xpose.msra.mxu0 0
        %1164 = vmatprep.subr.bf16.mxu0 0
        %1165 = vmatpush1.bf16.xpose.msra.mxu0 0
        %1166 = vmatprep.subr.bf16.mxu0 0
        %1167 = vmatpush1.bf16.xpose.msra.mxu0 0
        %1168 = vmatprep.subr.bf16.mxu0 0
        %1169 = vmatpush1.bf16.xpose.msra.mxu0 0
        %1170 = vmatprep.subr.bf16.mxu0 0
        %1171 = vmatpush1.bf16.xpose.msra.mxu0 0
        %1172 = vmatprep.subr.bf16.mxu0 0
        %1173 = vmatpush1.bf16.xpose.msra.mxu0 0
        %1174 = vmatprep.subr.bf16.mxu0 0
        %1175 = vmatpush1.bf16.xpose.msra.mxu0 0
        %1176 = vmatprep.mubr.bf16.mxu0 0
        %1177 = vmatmul.mubr.bf16.gmra.mrb[0].mxu0 %v1139
        %v1178 = vpop.f32.mrb[0].mxu0
        %v1179 = vadd.f32 %v641, %v1178
        %v1180 = vpop.f32.mrb[0].mxu0
        %v1181 = vpop.f32.mrb[0].mxu0
        %v1182 = vpop.f32.mrb[0].mxu0
        %1183 = vdwg.mxu0
        %v1184 = vsel %vm647, %v1129, -inf
        %1185 = vmax.xlane.f32.xlu0 %v1184
        %v1186 = vpop.xlane.xlu0 %1185
        %v1187 = vsel %vm647, %v1179, -inf
        %1188 = vmax.xlane.f32.xlu0 %v1187
        %v1189 = vpop.xlane.xlu0 %1188
        %v1190 = vsub.f32 %v1129, %v1186
        %v1191 = vsub.f32 %v1179, %v1189
        %v1192 = vmul.f32 %v1190, 1.442695
        %v1193 = vpow.pop %v1192
        %v1194 = vmul.f32 %v1191, 1.442695
        %v1195 = vpow.pop %v1194
        %v1196 = vsel %vm647, %v1193, 0.0
        %1197 = vadd.xlane.f32.xlu0 %v1196
        %v1198 = vpop.xlane.xlu0 %1197
        %v1199 = vsel %vm647, %v1195, 0.0
        %1200 = vadd.xlane.f32.xlu0 %v1199
        %v1201 = vpop.xlane.xlu0 %1200
        %v1202 = vrcp.pop %v1198
        %v1203 = vrcp.pop %v1201
        %v1204 = vmul.f32 %v1193, %v1202
        %v1205 = vmul.f32 %v1195, %v1203
        %v1206 = vpack.c.bf16 %v1204, %v1204
        %v1207 = vpack.c.bf16 %v1205, %v1205
        %1208 = vrot.lane.b32.xlu0 %v630, 48
        %v1209 = vpop.permute.xlu0 %1208
        %v1211 = vsel %vm647, %v1206, 0
        %v1214 = vsel %vm772, %v1209, 0
        %1216 = vmatprep.subr.bf16.mxu0 0
        %1217 = vmatpush1.bf16.msra.mxu0 %v1214
        %1218 = vmatprep.subr.bf16.mxu0 0
        %1219 = vmatpush1.bf16.msra.mxu0 0
        %1220 = vmatprep.subr.bf16.mxu0 0
        %1221 = vmatpush1.bf16.msra.mxu0 0
        %1222 = vmatprep.subr.bf16.mxu0 0
        %1223 = vmatpush1.bf16.msra.mxu0 0
        %1224 = vmatprep.subr.bf16.mxu0 0
        %1225 = vmatpush1.bf16.msra.mxu0 0
        %1226 = vmatprep.subr.bf16.mxu0 0
        %1227 = vmatpush1.bf16.msra.mxu0 0
        %1228 = vmatprep.subr.bf16.mxu0 0
        %1229 = vmatpush1.bf16.msra.mxu0 0
        %1230 = vmatprep.subr.bf16.mxu0 0
        %1231 = vmatpush1.bf16.msra.mxu0 0
        %1232 = vmatprep.subr.bf16.mxu0 0
        %1233 = vmatpush1.bf16.msra.mxu0 0
        %1234 = vmatprep.subr.bf16.mxu0 0
        %1235 = vmatpush1.bf16.msra.mxu0 0
        %1236 = vmatprep.subr.bf16.mxu0 0
        %1237 = vmatpush1.bf16.msra.mxu0 0
        %1238 = vmatprep.subr.bf16.mxu0 0
        %1239 = vmatpush1.bf16.msra.mxu0 0
        %1240 = vmatprep.subr.bf16.mxu0 0
        %1241 = vmatpush1.bf16.msra.mxu0 0
        %1242 = vmatprep.subr.bf16.mxu0 0
        %1243 = vmatpush1.bf16.msra.mxu0 0
        %1244 = vmatprep.subr.bf16.mxu0 0
        %1245 = vmatpush1.bf16.msra.mxu0 0
        %1246 = vmatprep.subr.bf16.mxu0 0
        %1247 = vmatpush1.bf16.msra.mxu0 0
        %1248 = vmatprep.mubr.bf16.mxu0 0
        %1249 = vmatmul.mubr.bf16.gmra.mrb[0].mxu0 %v1211
        %v1250 = vpop.f32.mrb[0].mxu0
        %v1251 = vadd.f32 0.0, %v1250
        %v1252 = vpop.f32.mrb[0].mxu0
        %v1253 = vpop.f32.mrb[0].mxu0
        %v1254 = vpop.f32.mrb[0].mxu0
        %1255 = vdwg.mxu0
        %1256 = vrot.lane.b32.xlu0 %v631, 48
        %v1257 = vpop.permute.xlu0 %1256
        %v1259 = vsel %vm647, %v1207, 0
        %v1262 = vsel %vm772, %v1257, 0
        %1264 = vmatprep.subr.bf16.mxu0 0
        %1265 = vmatpush1.bf16.msra.mxu0 %v1262
        %1266 = vmatprep.subr.bf16.mxu0 0
        %1267 = vmatpush1.bf16.msra.mxu0 0
        %1268 = vmatprep.subr.bf16.mxu0 0
        %1269 = vmatpush1.bf16.msra.mxu0 0
        %1270 = vmatprep.subr.bf16.mxu0 0
        %1271 = vmatpush1.bf16.msra.mxu0 0
        %1272 = vmatprep.subr.bf16.mxu0 0
        %1273 = vmatpush1.bf16.msra.mxu0 0
        %1274 = vmatprep.subr.bf16.mxu0 0
        %1275 = vmatpush1.bf16.msra.mxu0 0
        %1276 = vmatprep.subr.bf16.mxu0 0
        %1277 = vmatpush1.bf16.msra.mxu0 0
        %1278 = vmatprep.subr.bf16.mxu0 0
        %1279 = vmatpush1.bf16.msra.mxu0 0
        %1280 = vmatprep.subr.bf16.mxu0 0
        %1281 = vmatpush1.bf16.msra.mxu0 0
        %1282 = vmatprep.subr.bf16.mxu0 0
        %1283 = vmatpush1.bf16.msra.mxu0 0
        %1284 = vmatprep.subr.bf16.mxu0 0
        %1285 = vmatpush1.bf16.msra.mxu0 0
        %1286 = vmatprep.subr.bf16.mxu0 0
        %1287 = vmatpush1.bf16.msra.mxu0 0
        %1288 = vmatprep.subr.bf16.mxu0 0
        %1289 = vmatpush1.bf16.msra.mxu0 0
        %1290 = vmatprep.subr.bf16.mxu0 0
        %1291 = vmatpush1.bf16.msra.mxu0 0
        %1292 = vmatprep.subr.bf16.mxu0 0
        %1293 = vmatpush1.bf16.msra.mxu0 0
        %1294 = vmatprep.subr.bf16.mxu0 0
        %1295 = vmatpush1.bf16.msra.mxu0 0
        %1296 = vmatprep.mubr.bf16.mxu0 0
        %1297 = vmatmul.mubr.bf16.gmra.mrb[0].mxu0 %v1259
        %v1298 = vpop.f32.mrb[0].mxu0
        %v1299 = vadd.f32 0.0, %v1298
        %v1300 = vpop.f32.mrb[0].mxu0
        %v1301 = vpop.f32.mrb[0].mxu0
        %v1302 = vpop.f32.mrb[0].mxu0
        %1303 = vdwg.mxu0
        %1304 = vrot.lane.b32.xlu0 %v630, 104
        %v1305 = vpop.permute.xlu0 %1304
        %1306 = vrot.lane.b32.xlu0 %v630, 72
        %v1307 = vpop.permute.xlu0 %1306
        %v1309 = vsel %vm647, %v1305, 0
        %v1312 = vsel %vm647, %v1307, 0
        %1314 = vmatprep.subr.bf16.mxu0 0
        %1315 = vmatpush1.bf16.xpose.msra.mxu0 %v1312
        %1316 = vmatprep.subr.bf16.mxu0 0
        %1317 = vmatpush1.bf16.xpose.msra.mxu0 0
        %1318 = vmatprep.subr.bf16.mxu0 0
        %1319 = vmatpush1.bf16.xpose.msra.mxu0 0
        %1320 = vmatprep.subr.bf16.mxu0 0
        %1321 = vmatpush1.bf16.xpose.msra.mxu0 0
        %1322 = vmatprep.subr.bf16.mxu0 0
        %1323 = vmatpush1.bf16.xpose.msra.mxu0 0
        %1324 = vmatprep.subr.bf16.mxu0 0
        %1325 = vmatpush1.bf16.xpose.msra.mxu0 0
        %1326 = vmatprep.subr.bf16.mxu0 0
        %1327 = vmatpush1.bf16.xpose.msra.mxu0 0
        %1328 = vmatprep.subr.bf16.mxu0 0
        %1329 = vmatpush1.bf16.xpose.msra.mxu0 0
        %1330 = vmatprep.subr.bf16.mxu0 0
        %1331 = vmatpush1.bf16.xpose.msra.mxu0 0
        %1332 = vmatprep.subr.bf16.mxu0 0
        %1333 = vmatpush1.bf16.xpose.msra.mxu0 0
        %1334 = vmatprep.subr.bf16.mxu0 0
        %1335 = vmatpush1.bf16.xpose.msra.mxu0 0
        %1336 = vmatprep.subr.bf16.mxu0 0
        %1337 = vmatpush1.bf16.xpose.msra.mxu0 0
        %1338 = vmatprep.subr.bf16.mxu0 0
        %1339 = vmatpush1.bf16.xpose.msra.mxu0 0
        %1340 = vmatprep.subr.bf16.mxu0 0
        %1341 = vmatpush1.bf16.xpose.msra.mxu0 0
        %1342 = vmatprep.subr.bf16.mxu0 0
        %1343 = vmatpush1.bf16.xpose.msra.mxu0 0
        %1344 = vmatprep.subr.bf16.mxu0 0
        %1345 = vmatpush1.bf16.xpose.msra.mxu0 0
        %1346 = vmatprep.mubr.bf16.mxu0 0
        %1347 = vmatmul.mubr.bf16.gmra.mrb[0].mxu0 %v1309
        %v1348 = vpop.f32.mrb[0].mxu0
        %v1349 = vadd.f32 %v637, %v1348
        %v1350 = vpop.f32.mrb[0].mxu0
        %v1351 = vpop.f32.mrb[0].mxu0
        %v1352 = vpop.f32.mrb[0].mxu0
        %1353 = vdwg.mxu0
        %1354 = vrot.lane.b32.xlu0 %v631, 104
        %v1355 = vpop.permute.xlu0 %1354
        %1356 = vrot.lane.b32.xlu0 %v631, 72
        %v1357 = vpop.permute.xlu0 %1356
        %v1359 = vsel %vm647, %v1355, 0
        %v1362 = vsel %vm647, %v1357, 0
        %1364 = vmatprep.subr.bf16.mxu0 0
        %1365 = vmatpush1.bf16.xpose.msra.mxu0 %v1362
        %1366 = vmatprep.subr.bf16.mxu0 0
        %1367 = vmatpush1.bf16.xpose.msra.mxu0 0
        %1368 = vmatprep.subr.bf16.mxu0 0
        %1369 = vmatpush1.bf16.xpose.msra.mxu0 0
        %1370 = vmatprep.subr.bf16.mxu0 0
        %1371 = vmatpush1.bf16.xpose.msra.mxu0 0
        %1372 = vmatprep.subr.bf16.mxu0 0
        %1373 = vmatpush1.bf16.xpose.msra.mxu0 0
        %1374 = vmatprep.subr.bf16.mxu0 0
        %1375 = vmatpush1.bf16.xpose.msra.mxu0 0
        %1376 = vmatprep.subr.bf16.mxu0 0
        %1377 = vmatpush1.bf16.xpose.msra.mxu0 0
        %1378 = vmatprep.subr.bf16.mxu0 0
        %1379 = vmatpush1.bf16.xpose.msra.mxu0 0
        %1380 = vmatprep.subr.bf16.mxu0 0
        %1381 = vmatpush1.bf16.xpose.msra.mxu0 0
        %1382 = vmatprep.subr.bf16.mxu0 0
        %1383 = vmatpush1.bf16.xpose.msra.mxu0 0
        %1384 = vmatprep.subr.bf16.mxu0 0
        %1385 = vmatpush1.bf16.xpose.msra.mxu0 0
        %1386 = vmatprep.subr.bf16.mxu0 0
        %1387 = vmatpush1.bf16.xpose.msra.mxu0 0
        %1388 = vmatprep.subr.bf16.mxu0 0
        %1389 = vmatpush1.bf16.xpose.msra.mxu0 0
        %1390 = vmatprep.subr.bf16.mxu0 0
        %1391 = vmatpush1.bf16.xpose.msra.mxu0 0
        %1392 = vmatprep.subr.bf16.mxu0 0
        %1393 = vmatpush1.bf16.xpose.msra.mxu0 0
        %1394 = vmatprep.subr.bf16.mxu0 0
        %1395 = vmatpush1.bf16.xpose.msra.mxu0 0
        %1396 = vmatprep.mubr.bf16.mxu0 0
        %1397 = vmatmul.mubr.bf16.gmra.mrb[0].mxu0 %v1359
        %v1398 = vpop.f32.mrb[0].mxu0
        %v1399 = vadd.f32 %v641, %v1398
        %v1400 = vpop.f32.mrb[0].mxu0
        %v1401 = vpop.f32.mrb[0].mxu0
        %v1402 = vpop.f32.mrb[0].mxu0
        %1403 = vdwg.mxu0
        %v1404 = vsel %vm647, %v1349, -inf
        %1405 = vmax.xlane.f32.xlu0 %v1404
        %v1406 = vpop.xlane.xlu0 %1405
        %v1407 = vsel %vm647, %v1399, -inf
        %1408 = vmax.xlane.f32.xlu0 %v1407
        %v1409 = vpop.xlane.xlu0 %1408
        %v1410 = vsub.f32 %v1349, %v1406
        %v1411 = vsub.f32 %v1399, %v1409
        %v1412 = vmul.f32 %v1410, 1.442695
        %v1413 = vpow.pop %v1412
        %v1414 = vmul.f32 %v1411, 1.442695
        %v1415 = vpow.pop %v1414
        %v1416 = vsel %vm647, %v1413, 0.0
        %1417 = vadd.xlane.f32.xlu0 %v1416
        %v1418 = vpop.xlane.xlu0 %1417
        %v1419 = vsel %vm647, %v1415, 0.0
        %1420 = vadd.xlane.f32.xlu0 %v1419
        %v1421 = vpop.xlane.xlu0 %1420
        %v1422 = vrcp.pop %v1418
        %v1423 = vrcp.pop %v1421
        %v1424 = vmul.f32 %v1413, %v1422
        %v1425 = vmul.f32 %v1415, %v1423
        %v1426 = vpack.c.bf16 %v1424, %v1424
        %v1427 = vpack.c.bf16 %v1425, %v1425
        %1428 = vrot.lane.b32.xlu0 %v630, 40
        %v1429 = vpop.permute.xlu0 %1428
        %v1431 = vsel %vm647, %v1426, 0
        %v1434 = vsel %vm772, %v1429, 0
        %1436 = vmatprep.subr.bf16.mxu0 0
        %1437 = vmatpush1.bf16.msra.mxu0 %v1434
        %1438 = vmatprep.subr.bf16.mxu0 0
        %1439 = vmatpush1.bf16.msra.mxu0 0
        %1440 = vmatprep.subr.bf16.mxu0 0
        %1441 = vmatpush1.bf16.msra.mxu0 0
        %1442 = vmatprep.subr.bf16.mxu0 0
        %1443 = vmatpush1.bf16.msra.mxu0 0
        %1444 = vmatprep.subr.bf16.mxu0 0
        %1445 = vmatpush1.bf16.msra.mxu0 0
        %1446 = vmatprep.subr.bf16.mxu0 0
        %1447 = vmatpush1.bf16.msra.mxu0 0
        %1448 = vmatprep.subr.bf16.mxu0 0
        %1449 = vmatpush1.bf16.msra.mxu0 0
        %1450 = vmatprep.subr.bf16.mxu0 0
        %1451 = vmatpush1.bf16.msra.mxu0 0
        %1452 = vmatprep.subr.bf16.mxu0 0
        %1453 = vmatpush1.bf16.msra.mxu0 0
        %1454 = vmatprep.subr.bf16.mxu0 0
        %1455 = vmatpush1.bf16.msra.mxu0 0
        %1456 = vmatprep.subr.bf16.mxu0 0
        %1457 = vmatpush1.bf16.msra.mxu0 0
        %1458 = vmatprep.subr.bf16.mxu0 0
        %1459 = vmatpush1.bf16.msra.mxu0 0
        %1460 = vmatprep.subr.bf16.mxu0 0
        %1461 = vmatpush1.bf16.msra.mxu0 0
        %1462 = vmatprep.subr.bf16.mxu0 0
        %1463 = vmatpush1.bf16.msra.mxu0 0
        %1464 = vmatprep.subr.bf16.mxu0 0
        %1465 = vmatpush1.bf16.msra.mxu0 0
        %1466 = vmatprep.subr.bf16.mxu0 0
        %1467 = vmatpush1.bf16.msra.mxu0 0
        %1468 = vmatprep.mubr.bf16.mxu0 0
        %1469 = vmatmul.mubr.bf16.gmra.mrb[0].mxu0 %v1431
        %v1470 = vpop.f32.mrb[0].mxu0
        %v1471 = vadd.f32 0.0, %v1470
        %v1472 = vpop.f32.mrb[0].mxu0
        %v1473 = vpop.f32.mrb[0].mxu0
        %v1474 = vpop.f32.mrb[0].mxu0
        %1475 = vdwg.mxu0
        %1476 = vrot.lane.b32.xlu0 %v631, 40
        %v1477 = vpop.permute.xlu0 %1476
        %v1479 = vsel %vm647, %v1427, 0
        %v1482 = vsel %vm772, %v1477, 0
        %1484 = vmatprep.subr.bf16.mxu0 0
        %1485 = vmatpush1.bf16.msra.mxu0 %v1482
        %1486 = vmatprep.subr.bf16.mxu0 0
        %1487 = vmatpush1.bf16.msra.mxu0 0
        %1488 = vmatprep.subr.bf16.mxu0 0
        %1489 = vmatpush1.bf16.msra.mxu0 0
        %1490 = vmatprep.subr.bf16.mxu0 0
        %1491 = vmatpush1.bf16.msra.mxu0 0
        %1492 = vmatprep.subr.bf16.mxu0 0
        %1493 = vmatpush1.bf16.msra.mxu0 0
        %1494 = vmatprep.subr.bf16.mxu0 0
        %1495 = vmatpush1.bf16.msra.mxu0 0
        %1496 = vmatprep.subr.bf16.mxu0 0
        %1497 = vmatpush1.bf16.msra.mxu0 0
        %1498 = vmatprep.subr.bf16.mxu0 0
        %1499 = vmatpush1.bf16.msra.mxu0 0
        %1500 = vmatprep.subr.bf16.mxu0 0
        %1501 = vmatpush1.bf16.msra.mxu0 0
        %1502 = vmatprep.subr.bf16.mxu0 0
        %1503 = vmatpush1.bf16.msra.mxu0 0
        %1504 = vmatprep.subr.bf16.mxu0 0
        %1505 = vmatpush1.bf16.msra.mxu0 0
        %1506 = vmatprep.subr.bf16.mxu0 0
        %1507 = vmatpush1.bf16.msra.mxu0 0
        %1508 = vmatprep.subr.bf16.mxu0 0
        %1509 = vmatpush1.bf16.msra.mxu0 0
        %1510 = vmatprep.subr.bf16.mxu0 0
        %1511 = vmatpush1.bf16.msra.mxu0 0
        %1512 = vmatprep.subr.bf16.mxu0 0
        %1513 = vmatpush1.bf16.msra.mxu0 0
        %1514 = vmatprep.subr.bf16.mxu0 0
        %1515 = vmatpush1.bf16.msra.mxu0 0
        %1516 = vmatprep.mubr.bf16.mxu0 0
        %1517 = vmatmul.mubr.bf16.gmra.mrb[0].mxu0 %v1479
        %v1518 = vpop.f32.mrb[0].mxu0
        %v1519 = vadd.f32 0.0, %v1518
        %v1520 = vpop.f32.mrb[0].mxu0
        %v1521 = vpop.f32.mrb[0].mxu0
        %v1522 = vpop.f32.mrb[0].mxu0
        %1523 = vdwg.mxu0
        %1526 = vrot.lane.b32.xlu0 %v1031, 8
        %v1527 = vpop.permute.xlu0 %1526
        %1528 = vrot.lane.b32.xlu0 %v1079, 8
        %v1529 = vpop.permute.xlu0 %1528
        %1534 = vrot.lane.b32.xlu0 %v1251, 16
        %v1535 = vpop.permute.xlu0 %1534
        %1536 = vrot.lane.b32.xlu0 %v1299, 16
        %v1537 = vpop.permute.xlu0 %1536
        %1542 = vrot.lane.b32.xlu0 %v1471, 24
        %v1543 = vpop.permute.xlu0 %1542
        %1544 = vrot.lane.b32.xlu0 %v1519, 24
        %v1545 = vpop.permute.xlu0 %1544
        %v1548 = vsel %vm647, %v811, %v1527
        %v1549 = vsel %vm647, %v859, %v1529
        %vm1550 = vcmask 130048
        %v1551 = vsel %vm1550, %v1548, %v1535
        %v1552 = vsel %vm1550, %v1549, %v1537
        %vm1553 = vcmask 195584
        %v1554 = vsel %vm1553, %v1551, %v1543
        %v1555 = vsel %vm1553, %v1552, %v1545
        %v1556 = vpack.c.bf16 %v1555, %v1554
        %v1557 = vld [vmem:[%s489] sm:$0xf]
        %v1558 = vld [vmem:[%s489 + $0x4] sm:$0xf]
        %v1559 = vld [vmem:[%s489 + $0x8] sm:$0xf]
        %v1560 = vld [vmem:[%s489 + $0xc] sm:$0xf]
        %v1561 = vlaneseq
        %v1562 = vshrl.u32 %v1561, 7
        %v1563 = vsub.s32 1, %v1562
        %v1564 = vrot.slane %v561, %v1563
        %v1569 = vunpack.c.l.b16 %v1557
        %v1570 = vunpack.c.l.b16 %v1558
        %v1571 = vunpack.c.l.b16 %v1559
        %v1572 = vunpack.c.l.b16 %v1560
        %v1573 = vpack.c.b16 %v1570, %v1569
        %v1574 = vpack.c.b16 %v1572, %v1571
        %v1578 = vsel %vm583, %v1556, 0
        %1580 = vmatprep.subr.bf16.mxu0 0
        %1581 = vmatpush1.bf16.msra.mxu0 %v1573
        %1582 = vmatprep.subr.bf16.mxu0 0
        %1583 = vmatpush1.bf16.msra.mxu0 %v1574
        %1584 = vmatprep.subr.bf16.mxu0 0
        %1585 = vmatpush1.bf16.msra.mxu0 0
        %1586 = vmatprep.subr.bf16.mxu0 0
        %1587 = vmatpush1.bf16.msra.mxu0 0
        %1588 = vmatprep.subr.bf16.mxu0 0
        %1589 = vmatpush1.bf16.msra.mxu0 0
        %1590 = vmatprep.subr.bf16.mxu0 0
        %1591 = vmatpush1.bf16.msra.mxu0 0
        %1592 = vmatprep.subr.bf16.mxu0 0
        %1593 = vmatpush1.bf16.msra.mxu0 0
        %1594 = vmatprep.subr.bf16.mxu0 0
        %1595 = vmatpush1.bf16.msra.mxu0 0
        %1596 = vmatprep.subr.bf16.mxu0 0
        %1597 = vmatpush1.bf16.msra.mxu0 0
        %1598 = vmatprep.subr.bf16.mxu0 0
        %1599 = vmatpush1.bf16.msra.mxu0 0
        %1600 = vmatprep.subr.bf16.mxu0 0
        %1601 = vmatpush1.bf16.msra.mxu0 0
        %1602 = vmatprep.subr.bf16.mxu0 0
        %1603 = vmatpush1.bf16.msra.mxu0 0
        %1604 = vmatprep.subr.bf16.mxu0 0
        %1605 = vmatpush1.bf16.msra.mxu0 0
        %1606 = vmatprep.subr.bf16.mxu0 0
        %1607 = vmatpush1.bf16.msra.mxu0 0
        %1608 = vmatprep.subr.bf16.mxu0 0
        %1609 = vmatpush1.bf16.msra.mxu0 0
        %1610 = vmatprep.subr.bf16.mxu0 0
        %1611 = vmatpush1.bf16.msra.mxu0 0
        %1612 = vmatprep.mubr.bf16.mxu0 0
        %1613 = vmatmul.mubr.bf16.gmra.mrb[0].mxu0 %v1578
        %v1614 = vpop.f32.mrb[0].mxu0
        %v1615 = vadd.f32 %v1564, %v1614
        %v1616 = vpop.f32.mrb[0].mxu0
        %v1617 = vpop.f32.mrb[0].mxu0
        %v1618 = vadd.f32 %v1564, %v1617
        %v1619 = vpop.f32.mrb[0].mxu0
        %1620 = vdwg.mxu0
        %v1621 = vadd.f32 %v559, %v1615
        %v1622 = vadd.f32 %v560, %v1618
        %v1623 = vsel %vm583, %v1621, 0.0
        %1624 = vadd.xlane.f32.xlu0 %v1623
        %v1625 = vpop.xlane.xlu0 %1624
        %v1626 = vsel %vm583, %v1622, 0.0
        %1627 = vadd.xlane.f32.xlu0 %v1626
        %v1628 = vpop.xlane.xlu0 %1627
        %v1629 = vrcp.pop 32.0
        %v1630 = vmul.f32 %v1625, %v1629
        %v1631 = vmul.f32 %v1628, %v1629
        %v1632 = vsub.f32 %v1621, %v1630
        %v1633 = vsub.f32 %v1622, %v1631
        %v1634 = vmul.f32 %v1632, %v1632
        %v1635 = vmul.f32 %v1633, %v1633
        %v1636 = vsel %vm583, %v1634, 0.0
        %1637 = vadd.xlane.f32.xlu0 %v1636
        %v1638 = vpop.xlane.xlu0 %1637
        %v1639 = vsel %vm583, %v1635, 0.0
        %1640 = vadd.xlane.f32.xlu0 %v1639
        %v1641 = vpop.xlane.xlu0 %1640
        %v1642 = vmul.f32 %v1638, %v1629
        %v1643 = vmul.f32 %v1641, %v1629
        %v1644 = vadd.f32 %v1642, 1e-12
        %v1645 = vadd.f32 %v1643, 1e-12
        %v1646 = vrsqrt.pop %v1644
        %v1647 = vrsqrt.pop %v1645
        %v1648 = vmul.f32 %v1632, %v1646
        %v1649 = vmul.f32 %v1633, %v1647
        %v1650 = vlaneseq
        %v1651 = vshrl.u32 %v1650, 7
        %v1652 = vsub.s32 4, %v1651
        %v1653 = vrot.slane %v561, %v1652
        %v1654 = vmul.f32 %v1648, %v1653
        %v1655 = vmul.f32 %v1649, %v1653
        %v1656 = vlaneseq
        %v1657 = vshrl.u32 %v1656, 7
        %v1658 = vsub.s32 5, %v1657
        %v1659 = vrot.slane %v561, %v1658
        %v1660 = vadd.f32 %v1654, %v1659
        %v1661 = vadd.f32 %v1655, %v1659
        %v1662 = vpack.c.bf16 %v1661, %v1660
        %v1663 = vld [vmem:[%s494] sm:$0xf]
        %v1664 = vld [vmem:[%s494 + $0x4] sm:$0xf]
        %v1665 = vld [vmem:[%s494 + $0x8] sm:$0xf]
        %v1666 = vld [vmem:[%s494 + $0xc] sm:$0xf]
        %v1667 = vlaneseq
        %v1668 = vshrl.u32 %v1667, 7
        %v1669 = vsub.s32 2, %v1668
        %v1670 = vrot.slane %v561, %v1669
        %v1675 = vunpack.c.l.b16 %v1663
        %v1676 = vunpack.c.l.b16 %v1664
        %v1677 = vunpack.c.l.b16 %v1665
        %v1678 = vunpack.c.l.b16 %v1666
        %v1679 = vpack.c.b16 %v1676, %v1675
        %v1680 = vpack.c.b16 %v1678, %v1677
        %v1684 = vsel %vm583, %v1662, 0
        %1686 = vmatprep.subr.bf16.mxu0 0
        %1687 = vmatpush1.bf16.msra.mxu0 %v1679
        %1688 = vmatprep.subr.bf16.mxu0 0
        %1689 = vmatpush1.bf16.msra.mxu0 %v1680
        %1690 = vmatprep.subr.bf16.mxu0 0
        %1691 = vmatpush1.bf16.msra.mxu0 0
        %1692 = vmatprep.subr.bf16.mxu0 0
        %1693 = vmatpush1.bf16.msra.mxu0 0
        %1694 = vmatprep.subr.bf16.mxu0 0
        %1695 = vmatpush1.bf16.msra.mxu0 0
        %1696 = vmatprep.subr.bf16.mxu0 0
        %1697 = vmatpush1.bf16.msra.mxu0 0
        %1698 = vmatprep.subr.bf16.mxu0 0
        %1699 = vmatpush1.bf16.msra.mxu0 0
        %1700 = vmatprep.subr.bf16.mxu0 0
        %1701 = vmatpush1.bf16.msra.mxu0 0
        %1702 = vmatprep.subr.bf16.mxu0 0
        %1703 = vmatpush1.bf16.msra.mxu0 0
        %1704 = vmatprep.subr.bf16.mxu0 0
        %1705 = vmatpush1.bf16.msra.mxu0 0
        %1706 = vmatprep.subr.bf16.mxu0 0
        %1707 = vmatpush1.bf16.msra.mxu0 0
        %1708 = vmatprep.subr.bf16.mxu0 0
        %1709 = vmatpush1.bf16.msra.mxu0 0
        %1710 = vmatprep.subr.bf16.mxu0 0
        %1711 = vmatpush1.bf16.msra.mxu0 0
        %1712 = vmatprep.subr.bf16.mxu0 0
        %1713 = vmatpush1.bf16.msra.mxu0 0
        %1714 = vmatprep.subr.bf16.mxu0 0
        %1715 = vmatpush1.bf16.msra.mxu0 0
        %1716 = vmatprep.subr.bf16.mxu0 0
        %1717 = vmatpush1.bf16.msra.mxu0 0
        %1718 = vmatprep.mubr.bf16.mxu0 0
        %1719 = vmatmul.mubr.bf16.gmra.mrb[0].mxu0 %v1684
        %v1720 = vpop.f32.mrb[0].mxu0
        %v1721 = vadd.f32 %v1670, %v1720
        %v1722 = vpop.f32.mrb[0].mxu0
        %v1723 = vpop.f32.mrb[0].mxu0
        %v1724 = vadd.f32 %v1670, %v1723
        %v1725 = vpop.f32.mrb[0].mxu0
        %1726 = vdwg.mxu0
        %v1727 = vmul.f32 %v1721, %v1721
        %v1728 = vmul.f32 %v1724, %v1724
        %v1729 = vmul.f32 %v1721, %v1727
        %v1730 = vmul.f32 %v1724, %v1728
        %v1731 = vmul.f32 %v1729, 0.044715
        %v1732 = vmul.f32 %v1730, 0.044715
        %v1733 = vadd.f32 %v1721, %v1731
        %v1734 = vadd.f32 %v1724, %v1732
        %v1735 = vmul.f32 %v1733, 0.7978846
        %v1736 = vmul.f32 %v1734, 0.7978846
        %v1737 = vtanh.pop %v1735
        %v1738 = vtanh.pop %v1736
        %v1739 = vadd.f32 %v1737, 1.0
        %v1740 = vadd.f32 %v1738, 1.0
        %v1741 = vmul.f32 %v1739, 0.5
        %v1742 = vmul.f32 %v1740, 0.5
        %v1743 = vmul.f32 %v1721, %v1741
        %v1744 = vmul.f32 %v1724, %v1742
        %v1745 = vpack.c.bf16 %v1744, %v1743
        %v1746 = vld [vmem:[%s499] sm:$0xf]
        %v1747 = vld [vmem:[%s499 + $0x4] sm:$0xf]
        %v1748 = vld [vmem:[%s499 + $0x8] sm:$0xf]
        %v1749 = vld [vmem:[%s499 + $0xc] sm:$0xf]
        %v1750 = vld [vmem:[%s499 + $0x10] sm:$0xf]
        %v1751 = vld [vmem:[%s499 + $0x14] sm:$0xf]
        %v1752 = vld [vmem:[%s499 + $0x18] sm:$0xf]
        %v1753 = vld [vmem:[%s499 + $0x1c] sm:$0xf]
        %v1754 = vlaneseq
        %v1755 = vshrl.u32 %v1754, 7
        %v1756 = vsub.s32 3, %v1755
        %v1757 = vrot.slane %v561, %v1756
        %v1766 = vunpack.c.l.b16 %v1746
        %v1767 = vunpack.c.l.b16 %v1747
        %v1768 = vunpack.c.l.b16 %v1748
        %v1769 = vunpack.c.l.b16 %v1749
        %v1770 = vunpack.c.l.b16 %v1750
        %v1771 = vunpack.c.l.b16 %v1751
        %v1772 = vunpack.c.l.b16 %v1752
        %v1773 = vunpack.c.l.b16 %v1753
        %v1774 = vpack.c.b16 %v1767, %v1766
        %v1775 = vpack.c.b16 %v1769, %v1768
        %v1776 = vpack.c.b16 %v1771, %v1770
        %v1777 = vpack.c.b16 %v1773, %v1772
        %vm1782 = vcmask 523264
        %v1784 = vsel %vm1782, %v1745, 0
        %1786 = vmatprep.subr.bf16.mxu0 0
        %1787 = vmatpush1.bf16.msra.mxu0 %v1774
        %1788 = vmatprep.subr.bf16.mxu0 0
        %1789 = vmatpush1.bf16.msra.mxu0 %v1775
        %1790 = vmatprep.subr.bf16.mxu0 0
        %1791 = vmatpush1.bf16.msra.mxu0 %v1776
        %1792 = vmatprep.subr.bf16.mxu0 0
        %1793 = vmatpush1.bf16.msra.mxu0 %v1777
        %1794 = vmatprep.subr.bf16.mxu0 0
        %1795 = vmatpush1.bf16.msra.mxu0 0
        %1796 = vmatprep.subr.bf16.mxu0 0
        %1797 = vmatpush1.bf16.msra.mxu0 0
        %1798 = vmatprep.subr.bf16.mxu0 0
        %1799 = vmatpush1.bf16.msra.mxu0 0
        %1800 = vmatprep.subr.bf16.mxu0 0
        %1801 = vmatpush1.bf16.msra.mxu0 0
        %1802 = vmatprep.subr.bf16.mxu0 0
        %1803 = vmatpush1.bf16.msra.mxu0 0
        %1804 = vmatprep.subr.bf16.mxu0 0
        %1805 = vmatpush1.bf16.msra.mxu0 0
        %1806 = vmatprep.subr.bf16.mxu0 0
        %1807 = vmatpush1.bf16.msra.mxu0 0
        %1808 = vmatprep.subr.bf16.mxu0 0
        %1809 = vmatpush1.bf16.msra.mxu0 0
        %1810 = vmatprep.subr.bf16.mxu0 0
        %1811 = vmatpush1.bf16.msra.mxu0 0
        %1812 = vmatprep.subr.bf16.mxu0 0
        %1813 = vmatpush1.bf16.msra.mxu0 0
        %1814 = vmatprep.subr.bf16.mxu0 0
        %1815 = vmatpush1.bf16.msra.mxu0 0
        %1816 = vmatprep.subr.bf16.mxu0 0
        %1817 = vmatpush1.bf16.msra.mxu0 0
        %1818 = vmatprep.mubr.bf16.mxu0 0
        %1819 = vmatmul.mubr.bf16.gmra.mrb[0].mxu0 %v1784
        %v1820 = vpop.f32.mrb[0].mxu0
        %v1821 = vadd.f32 %v1757, %v1820
        %v1822 = vpop.f32.mrb[0].mxu0
        %v1823 = vpop.f32.mrb[0].mxu0
        %v1824 = vadd.f32 %v1757, %v1823
        %v1825 = vpop.f32.mrb[0].mxu0
        %1826 = vdwg.mxu0
        %v1827 = vadd.f32 %v1660, %v1821
        %v1828 = vadd.f32 %v1661, %v1824
        %v1829 = vsel %vm583, %v1827, 0.0
        %1830 = vadd.xlane.f32.xlu0 %v1829
        %v1831 = vpop.xlane.xlu0 %1830
        %v1832 = vsel %vm583, %v1828, 0.0
        %1833 = vadd.xlane.f32.xlu0 %v1832
        %v1834 = vpop.xlane.xlu0 %1833
        %v1835 = vmul.f32 %v1831, %v1629
        %v1836 = vmul.f32 %v1834, %v1629
        %v1837 = vsub.f32 %v1827, %v1835
        %v1838 = vsub.f32 %v1828, %v1836
        %v1839 = vmul.f32 %v1837, %v1837
        %v1840 = vmul.f32 %v1838, %v1838
        %v1841 = vsel %vm583, %v1839, 0.0
        %1842 = vadd.xlane.f32.xlu0 %v1841
        %v1843 = vpop.xlane.xlu0 %1842
        %v1844 = vsel %vm583, %v1840, 0.0
        %1845 = vadd.xlane.f32.xlu0 %v1844
        %v1846 = vpop.xlane.xlu0 %1845
        %v1847 = vmul.f32 %v1843, %v1629
        %v1848 = vmul.f32 %v1846, %v1629
        %v1849 = vadd.f32 %v1847, 1e-12
        %v1850 = vadd.f32 %v1848, 1e-12
        %v1851 = vrsqrt.pop %v1849
        %v1852 = vrsqrt.pop %v1850
        %v1853 = vmul.f32 %v1837, %v1851
        %v1854 = vmul.f32 %v1838, %v1852
        %v1855 = vlaneseq
        %v1856 = vshrl.u32 %v1855, 7
        %v1857 = vsub.s32 6, %v1856
        %v1858 = vrot.slane %v561, %v1857
        %v1859 = vmul.f32 %v1853, %v1858
        %v1860 = vmul.f32 %v1854, %v1858
        %v1861 = vlaneseq
        %v1862 = vshrl.u32 %v1861, 7
        %v1863 = vsub.s32 7, %v1862
        %v1864 = vrot.slane %v561, %v1863
        %v1865 = vadd.f32 %v1859, %v1864
        %v1866 = vadd.f32 %v1860, %v1864
        %1867 = vst.msk [vmem:[#allocation2] sm:$0xff] %vm583, %v1865
        %1868 = vst.msk [vmem:[#allocation2 + $0x8] sm:$0xff] %vm583, %v1866
        %p1869 = scmp.eq.s32.totalorder %s25, 1
        // Predicated region
        $region77: #{bert_classifier_forward.1} parent=71 // pred_check
          %p1870 = pneg %p1869
        $region78: #{bert_classifier_forward.1} parent=71 // pred_check_branch
          %1872 = sbr.rel (%p1870) target = $region80
        $region79: #{bert_classifier_forward.1} parent=71 // pred_region
          %v1874 = vrot.slane %v1866, 7
          %vm1876 = vcmask 1040384
          %v1877 = vsel %vm1876, %v1865, %v1874
          %v1878 = vpack.c.bf16 %v1877, %v1877
          %v1879 = vld [vmem:[%s9] sm:$0xf]
          %v1880 = vld [vmem:[%s9 + $0x4] sm:$0xf]
          %v1881 = vld [vmem:[%s9 + $0x8] sm:$0xf]
          %v1882 = vld [vmem:[%s9 + $0xc] sm:$0xf]
          %v1883 = vld [vmem:[%s10] sm:$0x1]
          %v1885 = vlaneseq
          %v1886 = vshrl.u32 %v1885, 7
          %v1887 = vsub.s32 0, %v1886
          %v1888 = vrot.slane %v1883, %v1887
          %v1894 = vunpack.c.l.b16 %v1879
          %v1895 = vunpack.c.l.b16 %v1880
          %v1896 = vunpack.c.l.b16 %v1881
          %v1897 = vunpack.c.l.b16 %v1882
          %v1898 = vpack.c.b16 %v1895, %v1894
          %v1899 = vpack.c.b16 %v1897, %v1896
          %v1903 = vsel %vm583, %v1878, 0
          %1905 = vmatprep.subr.bf16.mxu0 0
          %1906 = vmatpush1.bf16.msra.mxu0 %v1898
          %1907 = vmatprep.subr.bf16.mxu0 0
          %1908 = vmatpush1.bf16.msra.mxu0 %v1899
          %1909 = vmatprep.subr.bf16.mxu0 0
          %1910 = vmatpush1.bf16.msra.mxu0 0
          %1911 = vmatprep.subr.bf16.mxu0 0
          %1912 = vmatpush1.bf16.msra.mxu0 0
          %1913 = vmatprep.subr.bf16.mxu0 0
          %1914 = vmatpush1.bf16.msra.mxu0 0
          %1915 = vmatprep.subr.bf16.mxu0 0
          %1916 = vmatpush1.bf16.msra.mxu0 0
          %1917 = vmatprep.subr.bf16.mxu0 0
          %1918 = vmatpush1.bf16.msra.mxu0 0
          %1919 = vmatprep.subr.bf16.mxu0 0
          %1920 = vmatpush1.bf16.msra.mxu0 0
          %1921 = vmatprep.subr.bf16.mxu0 0
          %1922 = vmatpush1.bf16.msra.mxu0 0
          %1923 = vmatprep.subr.bf16.mxu0 0
          %1924 = vmatpush1.bf16.msra.mxu0 0
          %1925 = vmatprep.subr.bf16.mxu0 0
          %1926 = vmatpush1.bf16.msra.mxu0 0
          %1927 = vmatprep.subr.bf16.mxu0 0
          %1928 = vmatpush1.bf16.msra.mxu0 0
          %1929 = vmatprep.subr.bf16.mxu0 0
          %1930 = vmatpush1.bf16.msra.mxu0 0
          %1931 = vmatprep.subr.bf16.mxu0 0
          %1932 = vmatpush1.bf16.msra.mxu0 0
          %1933 = vmatprep.subr.bf16.mxu0 0
          %1934 = vmatpush1.bf16.msra.mxu0 0
          %1935 = vmatprep.subr.bf16.mxu0 0
          %1936 = vmatpush1.bf16.msra.mxu0 0
          %1937 = vmatprep.mubr.bf16.mxu0 0
          %1938 = vmatmul.mubr.bf16.gmra.mrb[0].mxu0 %v1903
          %v1939 = vpop.f32.mrb[0].mxu0
          %v1940 = vadd.f32 %v1888, %v1939
          %v1941 = vpop.f32.mrb[0].mxu0
          %v1942 = vpop.f32.mrb[0].mxu0
          %v1943 = vpop.f32.mrb[0].mxu0
          %1944 = vdwg.mxu0
          %v1945 = vtanh.pop %v1940
          %v1946 = vpack.c.bf16 %v1945, %v1945
          %v1947 = vld [vmem:[%s11] sm:$0xf]
          %v1948 = vld [vmem:[%s11 + $0x4] sm:$0xf]
          %v1949 = vld [vmem:[%s11 + $0x8] sm:$0xf]
          %v1950 = vld [vmem:[%s11 + $0xc] sm:$0xf]
          %v1951 = vld [vmem:[%s12] sm:$0x1]
          %v1953 = vlaneseq
          %v1954 = vshrl.u32 %v1953, 7
          %v1955 = vsub.s32 0, %v1954
          %v1956 = vrot.slane %v1951, %v1955
          %v1962 = vunpack.c.l.b16 %v1947
          %v1963 = vunpack.c.l.b16 %v1948
          %v1964 = vunpack.c.l.b16 %v1949
          %v1965 = vunpack.c.l.b16 %v1950
          %v1966 = vpack.c.b16 %v1963, %v1962
          %v1967 = vpack.c.b16 %v1965, %v1964
          %v1971 = vsel %vm583, %v1946, 0
          %1973 = vmatprep.subr.bf16.mxu0 0
          %1974 = vmatpush1.bf16.msra.mxu0 %v1966
          %1975 = vmatprep.subr.bf16.mxu0 0
          %1976 = vmatpush1.bf16.msra.mxu0 %v1967
          %1977 = vmatprep.subr.bf16.mxu0 0
          %1978 = vmatpush1.bf16.msra.mxu0 0
          %1979 = vmatprep.subr.bf16.mxu0 0
          %1980 = vmatpush1.bf16.msra.mxu0 0
          %1981 = vmatprep.subr.bf16.mxu0 0
          %1982 = vmatpush1.bf16.msra.mxu0 0
          %1983 = vmatprep.subr.bf16.mxu0 0
          %1984 = vmatpush1.bf16.msra.mxu0 0
          %1985 = vmatprep.subr.bf16.mxu0 0
          %1986 = vmatpush1.bf16.msra.mxu0 0
          %1987 = vmatprep.subr.bf16.mxu0 0
          %1988 = vmatpush1.bf16.msra.mxu0 0
          %1989 = vmatprep.subr.bf16.mxu0 0
          %1990 = vmatpush1.bf16.msra.mxu0 0
          %1991 = vmatprep.subr.bf16.mxu0 0
          %1992 = vmatpush1.bf16.msra.mxu0 0
          %1993 = vmatprep.subr.bf16.mxu0 0
          %1994 = vmatpush1.bf16.msra.mxu0 0
          %1995 = vmatprep.subr.bf16.mxu0 0
          %1996 = vmatpush1.bf16.msra.mxu0 0
          %1997 = vmatprep.subr.bf16.mxu0 0
          %1998 = vmatpush1.bf16.msra.mxu0 0
          %1999 = vmatprep.subr.bf16.mxu0 0
          %2000 = vmatpush1.bf16.msra.mxu0 0
          %2001 = vmatprep.subr.bf16.mxu0 0
          %2002 = vmatpush1.bf16.msra.mxu0 0
          %2003 = vmatprep.subr.bf16.mxu0 0
          %2004 = vmatpush1.bf16.msra.mxu0 0
          %2005 = vmatprep.mubr.bf16.mxu0 0
          %2006 = vmatmul.mubr.bf16.gmra.mrb[0].mxu0 %v1971
          %v2007 = vpop.f32.mrb[0].mxu0
          %v2008 = vadd.f32 %v1956, %v2007
          %v2009 = vpop.f32.mrb[0].mxu0
          %v2010 = vpop.f32.mrb[0].mxu0
          %v2011 = vpop.f32.mrb[0].mxu0
          %2012 = vdwg.mxu0
          %2013 = vst [vmem:[#allocation3] sm:$0x3] %v2008
        $region80: #{bert_classifier_forward.1} parent=71 // pred_fallthru
          _
        // Predicated region
        $region81: #{bert_classifier_forward.1} parent=71 // pred_check
          %p2014 = pneg %p336
        $region82: #{bert_classifier_forward.1} parent=71 // pred_check_branch
          %2016 = sbr.rel (%p2014) target = $region84
        $region83: #{bert_classifier_forward.1} parent=71 // pred_region
          %s2018 = ssub.s32 32, 32
          %2019 = vsyncadd [#allocation4], %s2018
          %s2021 = sshll.u32 [#allocation3], 4
          %s2022 = int_to_ptr.vmem [resolvable:$true] %s2021
          %2024 = dma.vmem_to_hbm [thread:$0]  %s2022, 32, %s13, [#allocation4]
        $region84: #{bert_classifier_forward.1} parent=71 // pred_fallthru
          _
        // Predicated region
        $region85: #{bert_classifier_forward.1} parent=71 // pred_check
          %p2025 = pneg %p336
        $region86: #{bert_classifier_forward.1} parent=71 // pred_check_branch
          %2027 = sbr.rel (%p2025) target = $region88
        $region87: #{bert_classifier_forward.1} parent=71 // pred_region
          %2028 = dma.done [#allocation4], 32
        $region88: #{bert_classifier_forward.1} parent=71 // pred_fallthru
          _
      $region72: #{bert_classifier_forward.1} parent=5 // pred_fallthru
        _
      %p2029 = scmp.le.s32.totalorder 2, %s20
      // Predicated region
      $region89: #{bert_classifier_forward.1} parent=5 // pred_check
        %p2030 = pneg %p2029
      $region90: #{bert_classifier_forward.1} parent=5 // pred_check_branch
        %2032 = sbr.rel (%p2030) target = $region92
      $region91: #{bert_classifier_forward.1} parent=5 // pred_region
        %s2033 = ssub.s32 %s20, 2
      $region92: #{bert_classifier_forward.1} parent=5 // pred_fallthru
        _
    $region6: #{bert_classifier_forward.1} parent=1 // loop_footer
      %s24 = sadd.s32 1, %s20
    $region7: #{bert_classifier_forward.1} parent=1 // loop_footer_branch
      %19 = sbr.rel target = $region3
    $region8: #{bert_classifier_forward.1} parent=1 // loop_exit
      _
    %2034 = vsyncpa [#allocation4], 1
    %s2035 = scalar_lea.sflag [#allocation4], 1
    %2036 = vsyncpa %s2035, 1

</llo_original>
